<compile_context>
chip_gen: v7x
topology: tpu7x:2x2x1
jax: 0.10.0
libtpu: 0.0.40
codegen_flags: <defaults>
</compile_context>

<pallas_src>
import jax
import jax.numpy as jnp
from jax import lax
from jax.experimental import pallas as pl
from jax.experimental.pallas import tpu as pltpu


def _signed_log(p):
    """sign(p) * log(|p| + 1) with the sign transferred via bit ops
    (saves the sign() + multiply VPU ops; log runs on the EUP)."""
    sign_bits = pltpu.bitcast(p, jnp.uint32) & jnp.uint32(0x80000000)
    mag = jnp.log(jnp.abs(p) + 1.0)          # >= 0, sign bit clear
    return pltpu.bitcast(pltpu.bitcast(mag, jnp.uint32) | sign_bits,
                         jnp.float32)


def make_cpb_kernel(num_linears, tile_i, tile_j, dim):
    """Kernel refs: (gq_ref, gkv_ref, w0, b0, ..., w_L, b_L, out_ref, x_buf).

    gq_ref : (tile_i, 2)            query coords for this i-tile
    gkv_ref: (1, 2, tile_j)         kv coords, channel-major (lane = kv index)
    w_k    : (out, in)   b_k: (out, 1)        (nn.Linear layout)
    out_ref: (1, o, tile_i*tile_j)  flat block of the (bg, o, i*j) output
    x_buf  : (dim, tile_i*tile_j)   f32 VMEM staging for layer-0 activations
    """
    nl = num_linears
    unrolled = tile_i <= 32

    def kernel(gq_ref, gkv_ref, *rest):
        x_buf = rest[-1]
        out_ref = rest[-2]
        prefs = rest[:-2]
        w = [prefs[2 * k][...] for k in range(nl)]
        b = [prefs[2 * k + 1][...] for k in range(nl)]

        kx = gkv_ref[0, 0:1, :]                        # (1, tile_j)
        ky = gkv_ref[0, 1:2, :]
        # Hoisted layer-0 operand broadcasts (not re-emitted per row).
        w0x = jnp.broadcast_to(w[0][:, 0:1], (dim, tile_j))
        w0y = jnp.broadcast_to(w[0][:, 1:2], (dim, tile_j))
        b0 = jnp.broadcast_to(b[0], (dim, tile_j))

        def layer0_row(qi):
            # Fused relative position for one query row (no HBM pos table).
            qx = gq_ref[pl.ds(qi, 1), 0:1]             # (1, 1)
            qy = gq_ref[pl.ds(qi, 1), 1:2]
            px = _signed_log(qx - kx)                  # (1, tile_j)
            py = _signed_log(qy - ky)
            # Linear(2 -> dim) + ReLU as VPU FMAs (K=2 degenerate matmul).
            # TODO(synk): for dim >~ 128 this layer could instead be a per-row
            # K=2 MXU matmul to unload the VALU slot.
            row = jnp.maximum(w0x * px + w0y * py + b0, 0.0)   # (dim, tile_j)
            off = qi * tile_j
            if not unrolled and tile_j % 128 == 0:
                off = pl.multiple_of(off, 128)
            x_buf[:, pl.ds(off, tile_j)] = row         # dense full-width store

        if unrolled:
            for qi in range(tile_i):
                layer0_row(qi)
        else:
            def body(qi, carry):
                layer0_row(qi)
                return carry
            lax.fori_loop(0, tile_i, body, 0, unroll=4)

        # Hidden Linear(dim->dim)+ReLU and final Linear(dim->o): one MXU
        # matmul each over all N = tile_i*tile_j columns, bf16 operands,
        # f32 accumulation.
        x = x_buf[...]
        for li in range(1, nl - 1):
            z = jnp.dot(w[li].astype(jnp.bfloat16), x.astype(jnp.bfloat16),
                        preferred_element_type=jnp.float32)
            x = jnp.maximum(z + b[li], 0.0)
        y = jnp.dot(w[nl - 1].astype(jnp.bfloat16), x.astype(jnp.bfloat16),
                    preferred_element_type=jnp.float32) + b[nl - 1]

        out_ref[0, :, :] = y                           # single dense store

    return kernel


def _pick_tile_i(i, j, dim, o, budget_bytes):
    """Largest i-tile whose staging/output blocks fit the VMEM budget, under
    the alignment the BlockSpecs need (tile_i % 8 == 0 and (tile_i*j) % 128
    == 0, or tile_i == i)."""
    per_n = 4 * (3 * dim + 2 * o + 8)      # rough resident bytes per flat elem
    n_max = max(1, budget_bytes // per_n)
    if i * j <= n_max:
        return i                           # whole per-bg problem in one step
    cands = [t for t in range(8, i, 8) if i % t == 0 and (t * j) % 128 == 0]
    fits = [t for t in cands if t * j <= n_max]
    if fits:
        return max(fits)
    if cands:
        return min(cands)                  # over budget; vmem_limit covers it
    # TODO(synk): i has no 8-aligned divisor with a lane-aligned tile; fall
    # back to the full (untiled) i and rely on the explicit vmem_limit_bytes.
    return i


def init_cpb_params(key, dim, heads, offset_groups, depth):
    """Deterministic init matching nn.Linear shapes: w (out, in), b (out, 1)."""
    o = heads // offset_groups
    sizes = [(dim, 2)] + [(dim, dim)] * (depth - 1) + [(o, dim)]
    params = []
    for fan_out, fan_in in sizes:
        key, kw, kb = jax.random.split(key, 3)
        bound = 1.0 / (fan_in ** 0.5)
        w = jax.random.uniform(kw, (fan_out, fan_in), jnp.float32, -bound, bound)
        b = jax.random.uniform(kb, (fan_out, 1), jnp.float32, -bound, bound)
        params += [w, b]
    return params


def cpb_forward(grid_q, grid_kv, params, *, heads, offset_groups,
                with_aux=True, vmem_budget_bytes=20 << 20):
    o = heads // offset_groups
    g = offset_groups
    h, w_, c = grid_q.shape
    bg, hk, wk, _ = grid_kv.shape
    assert c == 2 and bg % g == 0
    i = h * w_
    j = hk * wk
    b_out = bg // g
    dim = params[0].shape[0]
    num_linears = len(params) // 2

    gq = grid_q.reshape(i, 2).astype(jnp.float32)          # 'h w c -> (h w) c'
    gkv = grid_kv.reshape(bg, j, 2).astype(jnp.float32)    # 'b h w c -> b (h w) c'

    # Auxiliary outputs the module returns (channels-last, last dim = 2):
    # one XLA elementwise fusion written dense at HBM roofline; the kernel
    # never reads them back.  Skipped entirely with with_aux=False.
    if with_aux:
        pos = gq[None, :, None, :] - gkv[:, None, :, :]            # (bg,i,j,2)
        bias_back = jnp.sign(pos) * jnp.log(jnp.abs(pos) + 1.0)    # (bg,i,j,2)
        bias_to = bias_back.reshape(bg * i * j, 2)
    else:
        pos = bias_back = bias_to = None

    gkv_t = jnp.swapaxes(gkv, 1, 2)                                # (bg, 2, j)

    tile_i = _pick_tile_i(i, j, dim, o, vmem_budget_bytes)
    n = tile_i * j
    grid = (bg, i // tile_i)          # largest axis first; all-parallel grid

    kernel = make_cpb_kernel(num_linears, tile_i, j, dim)

    in_specs = [
        pl.BlockSpec((tile_i, 2), lambda bi, ii: (ii, 0)),          # grid_q
        pl.BlockSpec((1, 2, j), lambda bi, ii: (bi, 0, 0)),         # grid_kv^T
    ]
    # Weights/biases: constant block index -> loaded once, VMEM-resident.
    in_specs += [pl.BlockSpec(p.shape, lambda bi, ii: (0, 0)) for p in params]

    out_spec = pl.BlockSpec((1, o, n), lambda bi, ii: (bi, 0, ii))

    # Explicit scoped-VMEM sizing (v5e default is only 16 MiB; v7x has 64 MiB
    # physical).  Weights are counted double-buffered since pl.Buffered(1) is
    # not used.
    need = 2 * sum(int(p.size) * 4 for p in params)        # weights (dbl-buf)
    need += 2 * 4 * (tile_i * 2 + 2 * j)                   # gq / gkv blocks
    need += 2 * 4 * o * n                                  # output block (dbl)
    need += 4 * dim * n                                    # x_buf scratch
    need += 2 * 2 * dim * n + 4 * dim * n                  # bf16 copies + hidden
    need += 3 * 4 * dim * j                                # hoisted layer-0 bcasts
    vmem_limit = int(min(64 << 20, max(32 << 20, int(need * 1.4))))

    bias_flat = pl.pallas_call(
        kernel,
        grid=grid,
        in_specs=in_specs,
        out_specs=out_spec,
        out_shape=jax.ShapeDtypeStruct((bg, o, i * j), jnp.float32),
        scratch_shapes=[pltpu.VMEM((dim, n), jnp.float32)],
        compiler_params=pltpu.CompilerParams(
            dimension_semantics=("parallel", "parallel"),
            vmem_limit_bytes=vmem_limit),
    )(gq, gkv_t, *params)

    # 'b (g o) i j' is the kernel's native flat output order -> free reshape.
    bias = bias_flat.reshape(b_out, g * o, i, j)
    if with_aux:
        # '(b g) i j o' (channels-last) needs one XLA transpose of the output.
        bias_from = jnp.transpose(bias_flat, (0, 2, 1)).reshape(bg, i, j, o)
    else:
        bias_from = None

    return bias, pos, bias_back, bias_to, bias_from


def _reference(grid_q, grid_kv, params, *, heads, offset_groups):
    """Pure-JAX (f32) reference of the PyTorch forward."""
    o = heads // offset_groups
    g = offset_groups
    h, w, c = grid_q.shape
    bg = grid_kv.shape[0]
    i = h * w
    j = grid_kv.shape[1] * grid_kv.shape[2]
    gq = grid_q.reshape(1, i, c).astype(jnp.float32)
    gkv = grid_kv.reshape(bg, j, c).astype(jnp.float32)
    pos = gq[:, :, None, :] - gkv[:, None, :, :]
    x = jnp.sign(pos) * jnp.log(jnp.abs(pos) + 1.0)
    bias_back = x
    bias_to = bias_back.reshape(-1, c)
    num_linears = len(params) // 2
    for li in range(num_linears):
        x = x @ params[2 * li].T + params[2 * li + 1][:, 0]
        if li < num_linears - 1:
            x = jnp.maximum(x, 0.0)
    bias_from = x
    bias = bias_from.reshape(bg // g, g, i, j, o)
    bias = jnp.transpose(bias, (0, 1, 4, 2, 3)).reshape(bg // g, g * o, i, j)
    return bias, pos, bias_back, bias_to, bias_from


if __name__ == "__main__":
    # Small config: dim=32, heads=8, offset_groups=2, depth=2.
    dim, heads, offset_groups, depth = 32, 8, 2, 2
    batch = 2
    bg = batch * offset_groups        # grid_kv batch = B * offset_groups
    h = w = 4                         # query grid 4x4  -> i = 16
    hk = wk = 4                       # kv grid 4x4     -> j = 16

    key = jax.random.PRNGKey(0)
    k1, k2, k3 = jax.random.split(key, 3)
    grid_q = jax.random.uniform(k1, (h, w, 2), jnp.float32, -1.0, 1.0)
    grid_kv = jax.random.uniform(k2, (bg, hk, wk, 2), jnp.float32, -1.0, 1.0)
    params = init_cpb_params(k3, dim, heads, offset_groups, depth)

    @jax.jit
    def fwd(gq, gkv, ps):
        return cpb_forward(gq, gkv, ps, heads=heads,
                           offset_groups=offset_groups)

    outs = jax.block_until_ready(fwd(grid_q, grid_kv, params))
    refs = _reference(grid_q, grid_kv, params, heads=heads,
                      offset_groups=offset_groups)

    # bias / bias_from go through bf16 MXU matmuls; pos / bias_back / bias_to
    # are exact f32 elementwise.
    tols = [(1e-2, 1e-2), (1e-5, 1e-5), (1e-5, 1e-5), (1e-5, 1e-5),
            (1e-2, 1e-2)]
    for got, want, (rtol, atol) in zip(outs, refs, tols):
        assert got.shape == want.shape, (got.shape, want.shape)
        assert jnp.allclose(got, want, rtol=rtol, atol=atol), \
            float(jnp.max(jnp.abs(got - want)))

    print("KERNEL_OK")
</pallas_src>

<mosaic_0001>
module attributes {stable_mosaic.version = 11 : i64} {
  func.func @kernel(%arg0: i32, %arg1: i32, %arg2: memref<16x2xf32, #tpu.memory_space<vmem>>, %arg3: memref<1x2x16xf32, #tpu.memory_space<vmem>>, %arg4: memref<32x2xf32, #tpu.memory_space<vmem>>, %arg5: memref<32x1xf32, #tpu.memory_space<vmem>>, %arg6: memref<32x32xf32, #tpu.memory_space<vmem>>, %arg7: memref<32x1xf32, #tpu.memory_space<vmem>>, %arg8: memref<4x32xf32, #tpu.memory_space<vmem>>, %arg9: memref<4x1xf32, #tpu.memory_space<vmem>>, %arg10: memref<1x4x256xf32, #tpu.memory_space<vmem>>, %arg11: memref<32x256xf32, #tpu.memory_space<vmem>>) attributes {dimension_semantics = [#tpu.dimension_semantics<parallel>, #tpu.dimension_semantics<parallel>], iteration_bounds = array<i64: 4, 1>, scalar_prefetch = 0 : i64, scratch_operands = 1 : i64, tpu.core_type = #tpu.core_type<tc>, window_params = [{transform_indices = @transform_0, window_bounds = array<i64: 16, 2>}, {transform_indices = @transform_1, window_bounds = array<i64: 1, 2, 16>}, {pipeline_mode = #tpu.pipeline_mode<synchronous>, transform_indices = @transform_2, window_bounds = array<i64: 32, 2>}, {pipeline_mode = #tpu.pipeline_mode<synchronous>, transform_indices = @transform_3, window_bounds = array<i64: 32, 1>}, {pipeline_mode = #tpu.pipeline_mode<synchronous>, transform_indices = @transform_4, window_bounds = array<i64: 32, 32>}, {pipeline_mode = #tpu.pipeline_mode<synchronous>, transform_indices = @transform_5, window_bounds = array<i64: 32, 1>}, {pipeline_mode = #tpu.pipeline_mode<synchronous>, transform_indices = @transform_6, window_bounds = array<i64: 4, 32>}, {pipeline_mode = #tpu.pipeline_mode<synchronous>, transform_indices = @transform_7, window_bounds = array<i64: 4, 1>}, {transform_indices = @transform_8, window_bounds = array<i64: 1, 4, 256>}]} {
    %c0 = arith.constant 0 : index
    %c0_0 = arith.constant 0 : index
    %0 = vector.load %arg4[%c0, %c0_0] : memref<32x2xf32, #tpu.memory_space<vmem>>, vector<32x2xf32>
    %c0_1 = arith.constant 0 : index
    %c0_2 = arith.constant 0 : index
    %1 = vector.load %arg6[%c0_1, %c0_2] : memref<32x32xf32, #tpu.memory_space<vmem>>, vector<32x32xf32>
    %c0_3 = arith.constant 0 : index
    %c0_4 = arith.constant 0 : index
    %2 = vector.load %arg8[%c0_3, %c0_4] : memref<4x32xf32, #tpu.memory_space<vmem>>, vector<4x32xf32>
    %c0_5 = arith.constant 0 : index
    %c0_6 = arith.constant 0 : index
    %3 = vector.load %arg5[%c0_5, %c0_6] : memref<32x1xf32, #tpu.memory_space<vmem>>, vector<32x1xf32>
    %c0_7 = arith.constant 0 : index
    %c0_8 = arith.constant 0 : index
    %4 = vector.load %arg7[%c0_7, %c0_8] : memref<32x1xf32, #tpu.memory_space<vmem>>, vector<32x1xf32>
    %c0_9 = arith.constant 0 : index
    %c0_10 = arith.constant 0 : index
    %5 = vector.load %arg9[%c0_9, %c0_10] : memref<4x1xf32, #tpu.memory_space<vmem>>, vector<4x1xf32>
    %c0_11 = arith.constant 0 : index
    %c0_12 = arith.constant 0 : index
    %c0_13 = arith.constant 0 : index
    %6 = vector.load %arg3[%c0_11, %c0_12, %c0_13] : memref<1x2x16xf32, #tpu.memory_space<vmem>>, vector<1x1x16xf32>
    %7 = vector.shape_cast %6 : vector<1x1x16xf32> to vector<1x16xf32>
    %c0_14 = arith.constant 0 : index
    %c1 = arith.constant 1 : index
    %c0_15 = arith.constant 0 : index
    %8 = vector.load %arg3[%c0_14, %c1, %c0_15] : memref<1x2x16xf32, #tpu.memory_space<vmem>>, vector<1x1x16xf32>
    %9 = vector.shape_cast %8 : vector<1x1x16xf32> to vector<1x16xf32>
    %10 = vector.extract_strided_slice %0 {offsets = [0, 0], sizes = [32, 1], strides = [1, 1]} : vector<32x2xf32> to vector<32x1xf32>
    %11 = vector.shape_cast %10 : vector<32x1xf32> to vector<32x1xf32>
    %12 = vector.broadcast %11 : vector<32x1xf32> to vector<32x16xf32>
    %13 = vector.extract_strided_slice %0 {offsets = [0, 1], sizes = [32, 1], strides = [1, 1]} : vector<32x2xf32> to vector<32x1xf32>
    %14 = vector.shape_cast %13 : vector<32x1xf32> to vector<32x1xf32>
    %15 = vector.broadcast %14 : vector<32x1xf32> to vector<32x16xf32>
    %16 = vector.shape_cast %3 : vector<32x1xf32> to vector<32x1xf32>
    %17 = vector.broadcast %16 : vector<32x1xf32> to vector<32x16xf32>
    %c0_16 = arith.constant 0 : index
    %c0_17 = arith.constant 0 : index
    %18 = vector.load %arg2[%c0_16, %c0_17] : memref<16x2xf32, #tpu.memory_space<vmem>>, vector<1x1xf32>
    %c0_18 = arith.constant 0 : index
    %c1_19 = arith.constant 1 : index
    %19 = vector.load %arg2[%c0_18, %c1_19] : memref<16x2xf32, #tpu.memory_space<vmem>>, vector<1x1xf32>
    %20 = vector.broadcast %18 : vector<1x1xf32> to vector<1x16xf32>
    %21 = arith.subf %20, %7 : vector<1x16xf32>
    %22 = tpu.bitcast %21 : vector<1x16xf32> -> vector<1x16xi32>
    %c-2147483648_i32 = arith.constant -2147483648 : i32
    %23 = vector.broadcast %c-2147483648_i32 : i32 to vector<1x16xi32>
    %24 = arith.andi %22, %23 : vector<1x16xi32>
    %25 = math.absf %21 : vector<1x16xf32>
    %cst = arith.constant 1.000000e+00 : f32
    %26 = vector.broadcast %cst : f32 to vector<1x16xf32>
    %27 = arith.addf %25, %26 : vector<1x16xf32>
    %28 = math.log %27 : vector<1x16xf32>
    %29 = tpu.bitcast %28 : vector<1x16xf32> -> vector<1x16xi32>
    %30 = arith.ori %29, %24 : vector<1x16xi32>
    %31 = tpu.bitcast %30 : vector<1x16xi32> -> vector<1x16xf32>
    %32 = vector.broadcast %19 : vector<1x1xf32> to vector<1x16xf32>
    %33 = arith.subf %32, %9 : vector<1x16xf32>
    %34 = tpu.bitcast %33 : vector<1x16xf32> -> vector<1x16xi32>
    %c-2147483648_i32_20 = arith.constant -2147483648 : i32
    %35 = vector.broadcast %c-2147483648_i32_20 : i32 to vector<1x16xi32>
    %36 = arith.andi %34, %35 : vector<1x16xi32>
    %37 = math.absf %33 : vector<1x16xf32>
    %cst_21 = arith.constant 1.000000e+00 : f32
    %38 = vector.broadcast %cst_21 : f32 to vector<1x16xf32>
    %39 = arith.addf %37, %38 : vector<1x16xf32>
    %40 = math.log %39 : vector<1x16xf32>
    %41 = tpu.bitcast %40 : vector<1x16xf32> -> vector<1x16xi32>
    %42 = arith.ori %41, %36 : vector<1x16xi32>
    %43 = tpu.bitcast %42 : vector<1x16xi32> -> vector<1x16xf32>
    %44 = vector.broadcast %31 : vector<1x16xf32> to vector<32x16xf32>
    %45 = arith.mulf %12, %44 : vector<32x16xf32>
    %46 = vector.broadcast %43 : vector<1x16xf32> to vector<32x16xf32>
    %47 = arith.mulf %15, %46 : vector<32x16xf32>
    %48 = arith.addf %45, %47 : vector<32x16xf32>
    %49 = arith.addf %48, %17 : vector<32x16xf32>
    %cst_22 = arith.constant 0.000000e+00 : f32
    %50 = vector.broadcast %cst_22 : f32 to vector<32x16xf32>
    %51 = arith.maximumf %49, %50 : vector<32x16xf32>
    %c0_23 = arith.constant 0 : index
    %c0_24 = arith.constant 0 : index
    %52 = vector.load %arg11[%c0_23, %c0_24] : memref<32x256xf32, #tpu.memory_space<vmem>>, vector<32x16xf32>
    tpu.vector_store %arg11[%c0_23, %c0_24], %51 {strides = array<i32>} : memref<32x256xf32, #tpu.memory_space<vmem>>, vector<32x16xf32>,
    %c1_25 = arith.constant 1 : index
    %c0_26 = arith.constant 0 : index
    %53 = vector.load %arg2[%c1_25, %c0_26] : memref<16x2xf32, #tpu.memory_space<vmem>>, vector<1x1xf32>
    %c1_27 = arith.constant 1 : index
    %c1_28 = arith.constant 1 : index
    %54 = vector.load %arg2[%c1_27, %c1_28] : memref<16x2xf32, #tpu.memory_space<vmem>>, vector<1x1xf32>
    %55 = vector.broadcast %53 : vector<1x1xf32> to vector<1x16xf32>
    %56 = arith.subf %55, %7 : vector<1x16xf32>
    %57 = tpu.bitcast %56 : vector<1x16xf32> -> vector<1x16xi32>
    %c-2147483648_i32_29 = arith.constant -2147483648 : i32
    %58 = vector.broadcast %c-2147483648_i32_29 : i32 to vector<1x16xi32>
    %59 = arith.andi %57, %58 : vector<1x16xi32>
    %60 = math.absf %56 : vector<1x16xf32>
    %cst_30 = arith.constant 1.000000e+00 : f32
    %61 = vector.broadcast %cst_30 : f32 to vector<1x16xf32>
    %62 = arith.addf %60, %61 : vector<1x16xf32>
    %63 = math.log %62 : vector<1x16xf32>
    %64 = tpu.bitcast %63 : vector<1x16xf32> -> vector<1x16xi32>
    %65 = arith.ori %64, %59 : vector<1x16xi32>
    %66 = tpu.bitcast %65 : vector<1x16xi32> -> vector<1x16xf32>
    %67 = vector.broadcast %54 : vector<1x1xf32> to vector<1x16xf32>
    %68 = arith.subf %67, %9 : vector<1x16xf32>
    %69 = tpu.bitcast %68 : vector<1x16xf32> -> vector<1x16xi32>
    %c-2147483648_i32_31 = arith.constant -2147483648 : i32
    %70 = vector.broadcast %c-2147483648_i32_31 : i32 to vector<1x16xi32>
    %71 = arith.andi %69, %70 : vector<1x16xi32>
    %72 = math.absf %68 : vector<1x16xf32>
    %cst_32 = arith.constant 1.000000e+00 : f32
    %73 = vector.broadcast %cst_32 : f32 to vector<1x16xf32>
    %74 = arith.addf %72, %73 : vector<1x16xf32>
    %75 = math.log %74 : vector<1x16xf32>
    %76 = tpu.bitcast %75 : vector<1x16xf32> -> vector<1x16xi32>
    %77 = arith.ori %76, %71 : vector<1x16xi32>
    %78 = tpu.bitcast %77 : vector<1x16xi32> -> vector<1x16xf32>
    %79 = vector.broadcast %66 : vector<1x16xf32> to vector<32x16xf32>
    %80 = arith.mulf %12, %79 : vector<32x16xf32>
    %81 = vector.broadcast %78 : vector<1x16xf32> to vector<32x16xf32>
    %82 = arith.mulf %15, %81 : vector<32x16xf32>
    %83 = arith.addf %80, %82 : vector<32x16xf32>
    %84 = arith.addf %83, %17 : vector<32x16xf32>
    %cst_33 = arith.constant 0.000000e+00 : f32
    %85 = vector.broadcast %cst_33 : f32 to vector<32x16xf32>
    %86 = arith.maximumf %84, %85 : vector<32x16xf32>
    %c0_34 = arith.constant 0 : index
    %c16 = arith.constant 16 : index
    %87 = vector.load %arg11[%c0_34, %c16] : memref<32x256xf32, #tpu.memory_space<vmem>>, vector<32x16xf32>
    tpu.vector_store %arg11[%c0_34, %c16], %86 {strides = array<i32>} : memref<32x256xf32, #tpu.memory_space<vmem>>, vector<32x16xf32>,
    %c2 = arith.constant 2 : index
    %c0_35 = arith.constant 0 : index
    %88 = vector.load %arg2[%c2, %c0_35] : memref<16x2xf32, #tpu.memory_space<vmem>>, vector<1x1xf32>
    %c2_36 = arith.constant 2 : index
    %c1_37 = arith.constant 1 : index
    %89 = vector.load %arg2[%c2_36, %c1_37] : memref<16x2xf32, #tpu.memory_space<vmem>>, vector<1x1xf32>
    %90 = vector.broadcast %88 : vector<1x1xf32> to vector<1x16xf32>
    %91 = arith.subf %90, %7 : vector<1x16xf32>
    %92 = tpu.bitcast %91 : vector<1x16xf32> -> vector<1x16xi32>
    %c-2147483648_i32_38 = arith.constant -2147483648 : i32
    %93 = vector.broadcast %c-2147483648_i32_38 : i32 to vector<1x16xi32>
    %94 = arith.andi %92, %93 : vector<1x16xi32>
    %95 = math.absf %91 : vector<1x16xf32>
    %cst_39 = arith.constant 1.000000e+00 : f32
    %96 = vector.broadcast %cst_39 : f32 to vector<1x16xf32>
    %97 = arith.addf %95, %96 : vector<1x16xf32>
    %98 = math.log %97 : vector<1x16xf32>
    %99 = tpu.bitcast %98 : vector<1x16xf32> -> vector<1x16xi32>
    %100 = arith.ori %99, %94 : vector<1x16xi32>
    %101 = tpu.bitcast %100 : vector<1x16xi32> -> vector<1x16xf32>
    %102 = vector.broadcast %89 : vector<1x1xf32> to vector<1x16xf32>
    %103 = arith.subf %102, %9 : vector<1x16xf32>
    %104 = tpu.bitcast %103 : vector<1x16xf32> -> vector<1x16xi32>
    %c-2147483648_i32_40 = arith.constant -2147483648 : i32
    %105 = vector.broadcast %c-2147483648_i32_40 : i32 to vector<1x16xi32>
    %106 = arith.andi %104, %105 : vector<1x16xi32>
    %107 = math.absf %103 : vector<1x16xf32>
    %cst_41 = arith.constant 1.000000e+00 : f32
    %108 = vector.broadcast %cst_41 : f32 to vector<1x16xf32>
    %109 = arith.addf %107, %108 : vector<1x16xf32>
    %110 = math.log %109 : vector<1x16xf32>
    %111 = tpu.bitcast %110 : vector<1x16xf32> -> vector<1x16xi32>
    %112 = arith.ori %111, %106 : vector<1x16xi32>
    %113 = tpu.bitcast %112 : vector<1x16xi32> -> vector<1x16xf32>
    %114 = vector.broadcast %101 : vector<1x16xf32> to vector<32x16xf32>
    %115 = arith.mulf %12, %114 : vector<32x16xf32>
    %116 = vector.broadcast %113 : vector<1x16xf32> to vector<32x16xf32>
    %117 = arith.mulf %15, %116 : vector<32x16xf32>
    %118 = arith.addf %115, %117 : vector<32x16xf32>
    %119 = arith.addf %118, %17 : vector<32x16xf32>
    %cst_42 = arith.constant 0.000000e+00 : f32
    %120 = vector.broadcast %cst_42 : f32 to vector<32x16xf32>
    %121 = arith.maximumf %119, %120 : vector<32x16xf32>
    %c0_43 = arith.constant 0 : index
    %c32 = arith.constant 32 : index
    %122 = vector.load %arg11[%c0_43, %c32] : memref<32x256xf32, #tpu.memory_space<vmem>>, vector<32x16xf32>
    tpu.vector_store %arg11[%c0_43, %c32], %121 {strides = array<i32>} : memref<32x256xf32, #tpu.memory_space<vmem>>, vector<32x16xf32>,
    %c3 = arith.constant 3 : index
    %c0_44 = arith.constant 0 : index
    %123 = vector.load %arg2[%c3, %c0_44] : memref<16x2xf32, #tpu.memory_space<vmem>>, vector<1x1xf32>
    %c3_45 = arith.constant 3 : index
    %c1_46 = arith.constant 1 : index
    %124 = vector.load %arg2[%c3_45, %c1_46] : memref<16x2xf32, #tpu.memory_space<vmem>>, vector<1x1xf32>
    %125 = vector.broadcast %123 : vector<1x1xf32> to vector<1x16xf32>
    %126 = arith.subf %125, %7 : vector<1x16xf32>
    %127 = tpu.bitcast %126 : vector<1x16xf32> -> vector<1x16xi32>
    %c-2147483648_i32_47 = arith.constant -2147483648 : i32
    %128 = vector.broadcast %c-2147483648_i32_47 : i32 to vector<1x16xi32>
    %129 = arith.andi %127, %128 : vector<1x16xi32>
    %130 = math.absf %126 : vector<1x16xf32>
    %cst_48 = arith.constant 1.000000e+00 : f32
    %131 = vector.broadcast %cst_48 : f32 to vector<1x16xf32>
    %132 = arith.addf %130, %131 : vector<1x16xf32>
    %133 = math.log %132 : vector<1x16xf32>
    %134 = tpu.bitcast %133 : vector<1x16xf32> -> vector<1x16xi32>
    %135 = arith.ori %134, %129 : vector<1x16xi32>
    %136 = tpu.bitcast %135 : vector<1x16xi32> -> vector<1x16xf32>
    %137 = vector.broadcast %124 : vector<1x1xf32> to vector<1x16xf32>
    %138 = arith.subf %137, %9 : vector<1x16xf32>
    %139 = tpu.bitcast %138 : vector<1x16xf32> -> vector<1x16xi32>
    %c-2147483648_i32_49 = arith.constant -2147483648 : i32
    %140 = vector.broadcast %c-2147483648_i32_49 : i32 to vector<1x16xi32>
    %141 = arith.andi %139, %140 : vector<1x16xi32>
    %142 = math.absf %138 : vector<1x16xf32>
    %cst_50 = arith.constant 1.000000e+00 : f32
    %143 = vector.broadcast %cst_50 : f32 to vector<1x16xf32>
    %144 = arith.addf %142, %143 : vector<1x16xf32>
    %145 = math.log %144 : vector<1x16xf32>
    %146 = tpu.bitcast %145 : vector<1x16xf32> -> vector<1x16xi32>
    %147 = arith.ori %146, %141 : vector<1x16xi32>
    %148 = tpu.bitcast %147 : vector<1x16xi32> -> vector<1x16xf32>
    %149 = vector.broadcast %136 : vector<1x16xf32> to vector<32x16xf32>
    %150 = arith.mulf %12, %149 : vector<32x16xf32>
    %151 = vector.broadcast %148 : vector<1x16xf32> to vector<32x16xf32>
    %152 = arith.mulf %15, %151 : vector<32x16xf32>
    %153 = arith.addf %150, %152 : vector<32x16xf32>
    %154 = arith.addf %153, %17 : vector<32x16xf32>
    %cst_51 = arith.constant 0.000000e+00 : f32
    %155 = vector.broadcast %cst_51 : f32 to vector<32x16xf32>
    %156 = arith.maximumf %154, %155 : vector<32x16xf32>
    %c0_52 = arith.constant 0 : index
    %c48 = arith.constant 48 : index
    %157 = vector.load %arg11[%c0_52, %c48] : memref<32x256xf32, #tpu.memory_space<vmem>>, vector<32x16xf32>
    tpu.vector_store %arg11[%c0_52, %c48], %156 {strides = array<i32>} : memref<32x256xf32, #tpu.memory_space<vmem>>, vector<32x16xf32>,
    %c4 = arith.constant 4 : index
    %c0_53 = arith.constant 0 : index
    %158 = vector.load %arg2[%c4, %c0_53] : memref<16x2xf32, #tpu.memory_space<vmem>>, vector<1x1xf32>
    %c4_54 = arith.constant 4 : index
    %c1_55 = arith.constant 1 : index
    %159 = vector.load %arg2[%c4_54, %c1_55] : memref<16x2xf32, #tpu.memory_space<vmem>>, vector<1x1xf32>
    %160 = vector.broadcast %158 : vector<1x1xf32> to vector<1x16xf32>
    %161 = arith.subf %160, %7 : vector<1x16xf32>
    %162 = tpu.bitcast %161 : vector<1x16xf32> -> vector<1x16xi32>
    %c-2147483648_i32_56 = arith.constant -2147483648 : i32
    %163 = vector.broadcast %c-2147483648_i32_56 : i32 to vector<1x16xi32>
    %164 = arith.andi %162, %163 : vector<1x16xi32>
    %165 = math.absf %161 : vector<1x16xf32>
    %cst_57 = arith.constant 1.000000e+00 : f32
    %166 = vector.broadcast %cst_57 : f32 to vector<1x16xf32>
    %167 = arith.addf %165, %166 : vector<1x16xf32>
    %168 = math.log %167 : vector<1x16xf32>
    %169 = tpu.bitcast %168 : vector<1x16xf32> -> vector<1x16xi32>
    %170 = arith.ori %169, %164 : vector<1x16xi32>
    %171 = tpu.bitcast %170 : vector<1x16xi32> -> vector<1x16xf32>
    %172 = vector.broadcast %159 : vector<1x1xf32> to vector<1x16xf32>
    %173 = arith.subf %172, %9 : vector<1x16xf32>
    %174 = tpu.bitcast %173 : vector<1x16xf32> -> vector<1x16xi32>
    %c-2147483648_i32_58 = arith.constant -2147483648 : i32
    %175 = vector.broadcast %c-2147483648_i32_58 : i32 to vector<1x16xi32>
    %176 = arith.andi %174, %175 : vector<1x16xi32>
    %177 = math.absf %173 : vector<1x16xf32>
    %cst_59 = arith.constant 1.000000e+00 : f32
    %178 = vector.broadcast %cst_59 : f32 to vector<1x16xf32>
    %179 = arith.addf %177, %178 : vector<1x16xf32>
    %180 = math.log %179 : vector<1x16xf32>
    %181 = tpu.bitcast %180 : vector<1x16xf32> -> vector<1x16xi32>
    %182 = arith.ori %181, %176 : vector<1x16xi32>
    %183 = tpu.bitcast %182 : vector<1x16xi32> -> vector<1x16xf32>
    %184 = vector.broadcast %171 : vector<1x16xf32> to vector<32x16xf32>
    %185 = arith.mulf %12, %184 : vector<32x16xf32>
    %186 = vector.broadcast %183 : vector<1x16xf32> to vector<32x16xf32>
    %187 = arith.mulf %15, %186 : vector<32x16xf32>
    %188 = arith.addf %185, %187 : vector<32x16xf32>
    %189 = arith.addf %188, %17 : vector<32x16xf32>
    %cst_60 = arith.constant 0.000000e+00 : f32
    %190 = vector.broadcast %cst_60 : f32 to vector<32x16xf32>
    %191 = arith.maximumf %189, %190 : vector<32x16xf32>
    %c0_61 = arith.constant 0 : index
    %c64 = arith.constant 64 : index
    %192 = vector.load %arg11[%c0_61, %c64] : memref<32x256xf32, #tpu.memory_space<vmem>>, vector<32x16xf32>
    tpu.vector_store %arg11[%c0_61, %c64], %191 {strides = array<i32>} : memref<32x256xf32, #tpu.memory_space<vmem>>, vector<32x16xf32>,
    %c5 = arith.constant 5 : index
    %c0_62 = arith.constant 0 : index
    %193 = vector.load %arg2[%c5, %c0_62] : memref<16x2xf32, #tpu.memory_space<vmem>>, vector<1x1xf32>
    %c5_63 = arith.constant 5 : index
    %c1_64 = arith.constant 1 : index
    %194 = vector.load %arg2[%c5_63, %c1_64] : memref<16x2xf32, #tpu.memory_space<vmem>>, vector<1x1xf32>
    %195 = vector.broadcast %193 : vector<1x1xf32> to vector<1x16xf32>
    %196 = arith.subf %195, %7 : vector<1x16xf32>
    %197 = tpu.bitcast %196 : vector<1x16xf32> -> vector<1x16xi32>
    %c-2147483648_i32_65 = arith.constant -2147483648 : i32
    %198 = vector.broadcast %c-2147483648_i32_65 : i32 to vector<1x16xi32>
    %199 = arith.andi %197, %198 : vector<1x16xi32>
    %200 = math.absf %196 : vector<1x16xf32>
    %cst_66 = arith.constant 1.000000e+00 : f32
    %201 = vector.broadcast %cst_66 : f32 to vector<1x16xf32>
    %202 = arith.addf %200, %201 : vector<1x16xf32>
    %203 = math.log %202 : vector<1x16xf32>
    %204 = tpu.bitcast %203 : vector<1x16xf32> -> vector<1x16xi32>
    %205 = arith.ori %204, %199 : vector<1x16xi32>
    %206 = tpu.bitcast %205 : vector<1x16xi32> -> vector<1x16xf32>
    %207 = vector.broadcast %194 : vector<1x1xf32> to vector<1x16xf32>
    %208 = arith.subf %207, %9 : vector<1x16xf32>
    %209 = tpu.bitcast %208 : vector<1x16xf32> -> vector<1x16xi32>
    %c-2147483648_i32_67 = arith.constant -2147483648 : i32
    %210 = vector.broadcast %c-2147483648_i32_67 : i32 to vector<1x16xi32>
    %211 = arith.andi %209, %210 : vector<1x16xi32>
    %212 = math.absf %208 : vector<1x16xf32>
    %cst_68 = arith.constant 1.000000e+00 : f32
    %213 = vector.broadcast %cst_68 : f32 to vector<1x16xf32>
    %214 = arith.addf %212, %213 : vector<1x16xf32>
    %215 = math.log %214 : vector<1x16xf32>
    %216 = tpu.bitcast %215 : vector<1x16xf32> -> vector<1x16xi32>
    %217 = arith.ori %216, %211 : vector<1x16xi32>
    %218 = tpu.bitcast %217 : vector<1x16xi32> -> vector<1x16xf32>
    %219 = vector.broadcast %206 : vector<1x16xf32> to vector<32x16xf32>
    %220 = arith.mulf %12, %219 : vector<32x16xf32>
    %221 = vector.broadcast %218 : vector<1x16xf32> to vector<32x16xf32>
    %222 = arith.mulf %15, %221 : vector<32x16xf32>
    %223 = arith.addf %220, %222 : vector<32x16xf32>
    %224 = arith.addf %223, %17 : vector<32x16xf32>
    %cst_69 = arith.constant 0.000000e+00 : f32
    %225 = vector.broadcast %cst_69 : f32 to vector<32x16xf32>
    %226 = arith.maximumf %224, %225 : vector<32x16xf32>
    %c0_70 = arith.constant 0 : index
    %c80 = arith.constant 80 : index
    %227 = vector.load %arg11[%c0_70, %c80] : memref<32x256xf32, #tpu.memory_space<vmem>>, vector<32x16xf32>
    tpu.vector_store %arg11[%c0_70, %c80], %226 {strides = array<i32>} : memref<32x256xf32, #tpu.memory_space<vmem>>, vector<32x16xf32>,
    %c6 = arith.constant 6 : index
    %c0_71 = arith.constant 0 : index
    %228 = vector.load %arg2[%c6, %c0_71] : memref<16x2xf32, #tpu.memory_space<vmem>>, vector<1x1xf32>
    %c6_72 = arith.constant 6 : index
    %c1_73 = arith.constant 1 : index
    %229 = vector.load %arg2[%c6_72, %c1_73] : memref<16x2xf32, #tpu.memory_space<vmem>>, vector<1x1xf32>
    %230 = vector.broadcast %228 : vector<1x1xf32> to vector<1x16xf32>
    %231 = arith.subf %230, %7 : vector<1x16xf32>
    %232 = tpu.bitcast %231 : vector<1x16xf32> -> vector<1x16xi32>
    %c-2147483648_i32_74 = arith.constant -2147483648 : i32
    %233 = vector.broadcast %c-2147483648_i32_74 : i32 to vector<1x16xi32>
    %234 = arith.andi %232, %233 : vector<1x16xi32>
    %235 = math.absf %231 : vector<1x16xf32>
    %cst_75 = arith.constant 1.000000e+00 : f32
    %236 = vector.broadcast %cst_75 : f32 to vector<1x16xf32>
    %237 = arith.addf %235, %236 : vector<1x16xf32>
    %238 = math.log %237 : vector<1x16xf32>
    %239 = tpu.bitcast %238 : vector<1x16xf32> -> vector<1x16xi32>
    %240 = arith.ori %239, %234 : vector<1x16xi32>
    %241 = tpu.bitcast %240 : vector<1x16xi32> -> vector<1x16xf32>
    %242 = vector.broadcast %229 : vector<1x1xf32> to vector<1x16xf32>
    %243 = arith.subf %242, %9 : vector<1x16xf32>
    %244 = tpu.bitcast %243 : vector<1x16xf32> -> vector<1x16xi32>
    %c-2147483648_i32_76 = arith.constant -2147483648 : i32
    %245 = vector.broadcast %c-2147483648_i32_76 : i32 to vector<1x16xi32>
    %246 = arith.andi %244, %245 : vector<1x16xi32>
    %247 = math.absf %243 : vector<1x16xf32>
    %cst_77 = arith.constant 1.000000e+00 : f32
    %248 = vector.broadcast %cst_77 : f32 to vector<1x16xf32>
    %249 = arith.addf %247, %248 : vector<1x16xf32>
    %250 = math.log %249 : vector<1x16xf32>
    %251 = tpu.bitcast %250 : vector<1x16xf32> -> vector<1x16xi32>
    %252 = arith.ori %251, %246 : vector<1x16xi32>
    %253 = tpu.bitcast %252 : vector<1x16xi32> -> vector<1x16xf32>
    %254 = vector.broadcast %241 : vector<1x16xf32> to vector<32x16xf32>
    %255 = arith.mulf %12, %254 : vector<32x16xf32>
    %256 = vector.broadcast %253 : vector<1x16xf32> to vector<32x16xf32>
    %257 = arith.mulf %15, %256 : vector<32x16xf32>
    %258 = arith.addf %255, %257 : vector<32x16xf32>
    %259 = arith.addf %258, %17 : vector<32x16xf32>
    %cst_78 = arith.constant 0.000000e+00 : f32
    %260 = vector.broadcast %cst_78 : f32 to vector<32x16xf32>
    %261 = arith.maximumf %259, %260 : vector<32x16xf32>
    %c0_79 = arith.constant 0 : index
    %c96 = arith.constant 96 : index
    %262 = vector.load %arg11[%c0_79, %c96] : memref<32x256xf32, #tpu.memory_space<vmem>>, vector<32x16xf32>
    tpu.vector_store %arg11[%c0_79, %c96], %261 {strides = array<i32>} : memref<32x256xf32, #tpu.memory_space<vmem>>, vector<32x16xf32>,
    %c7 = arith.constant 7 : index
    %c0_80 = arith.constant 0 : index
    %263 = vector.load %arg2[%c7, %c0_80] : memref<16x2xf32, #tpu.memory_space<vmem>>, vector<1x1xf32>
    %c7_81 = arith.constant 7 : index
    %c1_82 = arith.constant 1 : index
    %264 = vector.load %arg2[%c7_81, %c1_82] : memref<16x2xf32, #tpu.memory_space<vmem>>, vector<1x1xf32>
    %265 = vector.broadcast %263 : vector<1x1xf32> to vector<1x16xf32>
    %266 = arith.subf %265, %7 : vector<1x16xf32>
    %267 = tpu.bitcast %266 : vector<1x16xf32> -> vector<1x16xi32>
    %c-2147483648_i32_83 = arith.constant -2147483648 : i32
    %268 = vector.broadcast %c-2147483648_i32_83 : i32 to vector<1x16xi32>
    %269 = arith.andi %267, %268 : vector<1x16xi32>
    %270 = math.absf %266 : vector<1x16xf32>
    %cst_84 = arith.constant 1.000000e+00 : f32
    %271 = vector.broadcast %cst_84 : f32 to vector<1x16xf32>
    %272 = arith.addf %270, %271 : vector<1x16xf32>
    %273 = math.log %272 : vector<1x16xf32>
    %274 = tpu.bitcast %273 : vector<1x16xf32> -> vector<1x16xi32>
    %275 = arith.ori %274, %269 : vector<1x16xi32>
    %276 = tpu.bitcast %275 : vector<1x16xi32> -> vector<1x16xf32>
    %277 = vector.broadcast %264 : vector<1x1xf32> to vector<1x16xf32>
    %278 = arith.subf %277, %9 : vector<1x16xf32>
    %279 = tpu.bitcast %278 : vector<1x16xf32> -> vector<1x16xi32>
    %c-2147483648_i32_85 = arith.constant -2147483648 : i32
    %280 = vector.broadcast %c-2147483648_i32_85 : i32 to vector<1x16xi32>
    %281 = arith.andi %279, %280 : vector<1x16xi32>
    %282 = math.absf %278 : vector<1x16xf32>
    %cst_86 = arith.constant 1.000000e+00 : f32
    %283 = vector.broadcast %cst_86 : f32 to vector<1x16xf32>
    %284 = arith.addf %282, %283 : vector<1x16xf32>
    %285 = math.log %284 : vector<1x16xf32>
    %286 = tpu.bitcast %285 : vector<1x16xf32> -> vector<1x16xi32>
    %287 = arith.ori %286, %281 : vector<1x16xi32>
    %288 = tpu.bitcast %287 : vector<1x16xi32> -> vector<1x16xf32>
    %289 = vector.broadcast %276 : vector<1x16xf32> to vector<32x16xf32>
    %290 = arith.mulf %12, %289 : vector<32x16xf32>
    %291 = vector.broadcast %288 : vector<1x16xf32> to vector<32x16xf32>
    %292 = arith.mulf %15, %291 : vector<32x16xf32>
    %293 = arith.addf %290, %292 : vector<32x16xf32>
    %294 = arith.addf %293, %17 : vector<32x16xf32>
    %cst_87 = arith.constant 0.000000e+00 : f32
    %295 = vector.broadcast %cst_87 : f32 to vector<32x16xf32>
    %296 = arith.maximumf %294, %295 : vector<32x16xf32>
    %c0_88 = arith.constant 0 : index
    %c112 = arith.constant 112 : index
    %297 = vector.load %arg11[%c0_88, %c112] : memref<32x256xf32, #tpu.memory_space<vmem>>, vector<32x16xf32>
    tpu.vector_store %arg11[%c0_88, %c112], %296 {strides = array<i32>} : memref<32x256xf32, #tpu.memory_space<vmem>>, vector<32x16xf32>,
    %c8 = arith.constant 8 : index
    %c0_89 = arith.constant 0 : index
    %298 = vector.load %arg2[%c8, %c0_89] : memref<16x2xf32, #tpu.memory_space<vmem>>, vector<1x1xf32>
    %c8_90 = arith.constant 8 : index
    %c1_91 = arith.constant 1 : index
    %299 = vector.load %arg2[%c8_90, %c1_91] : memref<16x2xf32, #tpu.memory_space<vmem>>, vector<1x1xf32>
    %300 = vector.broadcast %298 : vector<1x1xf32> to vector<1x16xf32>
    %301 = arith.subf %300, %7 : vector<1x16xf32>
    %302 = tpu.bitcast %301 : vector<1x16xf32> -> vector<1x16xi32>
    %c-2147483648_i32_92 = arith.constant -2147483648 : i32
    %303 = vector.broadcast %c-2147483648_i32_92 : i32 to vector<1x16xi32>
    %304 = arith.andi %302, %303 : vector<1x16xi32>
    %305 = math.absf %301 : vector<1x16xf32>
    %cst_93 = arith.constant 1.000000e+00 : f32
    %306 = vector.broadcast %cst_93 : f32 to vector<1x16xf32>
    %307 = arith.addf %305, %306 : vector<1x16xf32>
    %308 = math.log %307 : vector<1x16xf32>
    %309 = tpu.bitcast %308 : vector<1x16xf32> -> vector<1x16xi32>
    %310 = arith.ori %309, %304 : vector<1x16xi32>
    %311 = tpu.bitcast %310 : vector<1x16xi32> -> vector<1x16xf32>
    %312 = vector.broadcast %299 : vector<1x1xf32> to vector<1x16xf32>
    %313 = arith.subf %312, %9 : vector<1x16xf32>
    %314 = tpu.bitcast %313 : vector<1x16xf32> -> vector<1x16xi32>
    %c-2147483648_i32_94 = arith.constant -2147483648 : i32
    %315 = vector.broadcast %c-2147483648_i32_94 : i32 to vector<1x16xi32>
    %316 = arith.andi %314, %315 : vector<1x16xi32>
    %317 = math.absf %313 : vector<1x16xf32>
    %cst_95 = arith.constant 1.000000e+00 : f32
    %318 = vector.broadcast %cst_95 : f32 to vector<1x16xf32>
    %319 = arith.addf %317, %318 : vector<1x16xf32>
    %320 = math.log %319 : vector<1x16xf32>
    %321 = tpu.bitcast %320 : vector<1x16xf32> -> vector<1x16xi32>
    %322 = arith.ori %321, %316 : vector<1x16xi32>
    %323 = tpu.bitcast %322 : vector<1x16xi32> -> vector<1x16xf32>
    %324 = vector.broadcast %311 : vector<1x16xf32> to vector<32x16xf32>
    %325 = arith.mulf %12, %324 : vector<32x16xf32>
    %326 = vector.broadcast %323 : vector<1x16xf32> to vector<32x16xf32>
    %327 = arith.mulf %15, %326 : vector<32x16xf32>
    %328 = arith.addf %325, %327 : vector<32x16xf32>
    %329 = arith.addf %328, %17 : vector<32x16xf32>
    %cst_96 = arith.constant 0.000000e+00 : f32
    %330 = vector.broadcast %cst_96 : f32 to vector<32x16xf32>
    %331 = arith.maximumf %329, %330 : vector<32x16xf32>
    %c0_97 = arith.constant 0 : index
    %c128 = arith.constant 128 : index
    %332 = vector.load %arg11[%c0_97, %c128] : memref<32x256xf32, #tpu.memory_space<vmem>>, vector<32x16xf32>
    tpu.vector_store %arg11[%c0_97, %c128], %331 {strides = array<i32>} : memref<32x256xf32, #tpu.memory_space<vmem>>, vector<32x16xf32>,
    %c9 = arith.constant 9 : index
    %c0_98 = arith.constant 0 : index
    %333 = vector.load %arg2[%c9, %c0_98] : memref<16x2xf32, #tpu.memory_space<vmem>>, vector<1x1xf32>
    %c9_99 = arith.constant 9 : index
    %c1_100 = arith.constant 1 : index
    %334 = vector.load %arg2[%c9_99, %c1_100] : memref<16x2xf32, #tpu.memory_space<vmem>>, vector<1x1xf32>
    %335 = vector.broadcast %333 : vector<1x1xf32> to vector<1x16xf32>
    %336 = arith.subf %335, %7 : vector<1x16xf32>
    %337 = tpu.bitcast %336 : vector<1x16xf32> -> vector<1x16xi32>
    %c-2147483648_i32_101 = arith.constant -2147483648 : i32
    %338 = vector.broadcast %c-2147483648_i32_101 : i32 to vector<1x16xi32>
    %339 = arith.andi %337, %338 : vector<1x16xi32>
    %340 = math.absf %336 : vector<1x16xf32>
    %cst_102 = arith.constant 1.000000e+00 : f32
    %341 = vector.broadcast %cst_102 : f32 to vector<1x16xf32>
    %342 = arith.addf %340, %341 : vector<1x16xf32>
    %343 = math.log %342 : vector<1x16xf32>
    %344 = tpu.bitcast %343 : vector<1x16xf32> -> vector<1x16xi32>
    %345 = arith.ori %344, %339 : vector<1x16xi32>
    %346 = tpu.bitcast %345 : vector<1x16xi32> -> vector<1x16xf32>
    %347 = vector.broadcast %334 : vector<1x1xf32> to vector<1x16xf32>
    %348 = arith.subf %347, %9 : vector<1x16xf32>
    %349 = tpu.bitcast %348 : vector<1x16xf32> -> vector<1x16xi32>
    %c-2147483648_i32_103 = arith.constant -2147483648 : i32
    %350 = vector.broadcast %c-2147483648_i32_103 : i32 to vector<1x16xi32>
    %351 = arith.andi %349, %350 : vector<1x16xi32>
    %352 = math.absf %348 : vector<1x16xf32>
    %cst_104 = arith.constant 1.000000e+00 : f32
    %353 = vector.broadcast %cst_104 : f32 to vector<1x16xf32>
    %354 = arith.addf %352, %353 : vector<1x16xf32>
    %355 = math.log %354 : vector<1x16xf32>
    %356 = tpu.bitcast %355 : vector<1x16xf32> -> vector<1x16xi32>
    %357 = arith.ori %356, %351 : vector<1x16xi32>
    %358 = tpu.bitcast %357 : vector<1x16xi32> -> vector<1x16xf32>
    %359 = vector.broadcast %346 : vector<1x16xf32> to vector<32x16xf32>
    %360 = arith.mulf %12, %359 : vector<32x16xf32>
    %361 = vector.broadcast %358 : vector<1x16xf32> to vector<32x16xf32>
    %362 = arith.mulf %15, %361 : vector<32x16xf32>
    %363 = arith.addf %360, %362 : vector<32x16xf32>
    %364 = arith.addf %363, %17 : vector<32x16xf32>
    %cst_105 = arith.constant 0.000000e+00 : f32
    %365 = vector.broadcast %cst_105 : f32 to vector<32x16xf32>
    %366 = arith.maximumf %364, %365 : vector<32x16xf32>
    %c0_106 = arith.constant 0 : index
    %c144 = arith.constant 144 : index
    %367 = vector.load %arg11[%c0_106, %c144] : memref<32x256xf32, #tpu.memory_space<vmem>>, vector<32x16xf32>
    tpu.vector_store %arg11[%c0_106, %c144], %366 {strides = array<i32>} : memref<32x256xf32, #tpu.memory_space<vmem>>, vector<32x16xf32>,
    %c10 = arith.constant 10 : index
    %c0_107 = arith.constant 0 : index
    %368 = vector.load %arg2[%c10, %c0_107] : memref<16x2xf32, #tpu.memory_space<vmem>>, vector<1x1xf32>
    %c10_108 = arith.constant 10 : index
    %c1_109 = arith.constant 1 : index
    %369 = vector.load %arg2[%c10_108, %c1_109] : memref<16x2xf32, #tpu.memory_space<vmem>>, vector<1x1xf32>
    %370 = vector.broadcast %368 : vector<1x1xf32> to vector<1x16xf32>
    %371 = arith.subf %370, %7 : vector<1x16xf32>
    %372 = tpu.bitcast %371 : vector<1x16xf32> -> vector<1x16xi32>
    %c-2147483648_i32_110 = arith.constant -2147483648 : i32
    %373 = vector.broadcast %c-2147483648_i32_110 : i32 to vector<1x16xi32>
    %374 = arith.andi %372, %373 : vector<1x16xi32>
    %375 = math.absf %371 : vector<1x16xf32>
    %cst_111 = arith.constant 1.000000e+00 : f32
    %376 = vector.broadcast %cst_111 : f32 to vector<1x16xf32>
    %377 = arith.addf %375, %376 : vector<1x16xf32>
    %378 = math.log %377 : vector<1x16xf32>
    %379 = tpu.bitcast %378 : vector<1x16xf32> -> vector<1x16xi32>
    %380 = arith.ori %379, %374 : vector<1x16xi32>
    %381 = tpu.bitcast %380 : vector<1x16xi32> -> vector<1x16xf32>
    %382 = vector.broadcast %369 : vector<1x1xf32> to vector<1x16xf32>
    %383 = arith.subf %382, %9 : vector<1x16xf32>
    %384 = tpu.bitcast %383 : vector<1x16xf32> -> vector<1x16xi32>
    %c-2147483648_i32_112 = arith.constant -2147483648 : i32
    %385 = vector.broadcast %c-2147483648_i32_112 : i32 to vector<1x16xi32>
    %386 = arith.andi %384, %385 : vector<1x16xi32>
    %387 = math.absf %383 : vector<1x16xf32>
    %cst_113 = arith.constant 1.000000e+00 : f32
    %388 = vector.broadcast %cst_113 : f32 to vector<1x16xf32>
    %389 = arith.addf %387, %388 : vector<1x16xf32>
    %390 = math.log %389 : vector<1x16xf32>
    %391 = tpu.bitcast %390 : vector<1x16xf32> -> vector<1x16xi32>
    %392 = arith.ori %391, %386 : vector<1x16xi32>
    %393 = tpu.bitcast %392 : vector<1x16xi32> -> vector<1x16xf32>
    %394 = vector.broadcast %381 : vector<1x16xf32> to vector<32x16xf32>
    %395 = arith.mulf %12, %394 : vector<32x16xf32>
    %396 = vector.broadcast %393 : vector<1x16xf32> to vector<32x16xf32>
    %397 = arith.mulf %15, %396 : vector<32x16xf32>
    %398 = arith.addf %395, %397 : vector<32x16xf32>
    %399 = arith.addf %398, %17 : vector<32x16xf32>
    %cst_114 = arith.constant 0.000000e+00 : f32
    %400 = vector.broadcast %cst_114 : f32 to vector<32x16xf32>
    %401 = arith.maximumf %399, %400 : vector<32x16xf32>
    %c0_115 = arith.constant 0 : index
    %c160 = arith.constant 160 : index
    %402 = vector.load %arg11[%c0_115, %c160] : memref<32x256xf32, #tpu.memory_space<vmem>>, vector<32x16xf32>
    tpu.vector_store %arg11[%c0_115, %c160], %401 {strides = array<i32>} : memref<32x256xf32, #tpu.memory_space<vmem>>, vector<32x16xf32>,
    %c11 = arith.constant 11 : index
    %c0_116 = arith.constant 0 : index
    %403 = vector.load %arg2[%c11, %c0_116] : memref<16x2xf32, #tpu.memory_space<vmem>>, vector<1x1xf32>
    %c11_117 = arith.constant 11 : index
    %c1_118 = arith.constant 1 : index
    %404 = vector.load %arg2[%c11_117, %c1_118] : memref<16x2xf32, #tpu.memory_space<vmem>>, vector<1x1xf32>
    %405 = vector.broadcast %403 : vector<1x1xf32> to vector<1x16xf32>
    %406 = arith.subf %405, %7 : vector<1x16xf32>
    %407 = tpu.bitcast %406 : vector<1x16xf32> -> vector<1x16xi32>
    %c-2147483648_i32_119 = arith.constant -2147483648 : i32
    %408 = vector.broadcast %c-2147483648_i32_119 : i32 to vector<1x16xi32>
    %409 = arith.andi %407, %408 : vector<1x16xi32>
    %410 = math.absf %406 : vector<1x16xf32>
    %cst_120 = arith.constant 1.000000e+00 : f32
    %411 = vector.broadcast %cst_120 : f32 to vector<1x16xf32>
    %412 = arith.addf %410, %411 : vector<1x16xf32>
    %413 = math.log %412 : vector<1x16xf32>
    %414 = tpu.bitcast %413 : vector<1x16xf32> -> vector<1x16xi32>
    %415 = arith.ori %414, %409 : vector<1x16xi32>
    %416 = tpu.bitcast %415 : vector<1x16xi32> -> vector<1x16xf32>
    %417 = vector.broadcast %404 : vector<1x1xf32> to vector<1x16xf32>
    %418 = arith.subf %417, %9 : vector<1x16xf32>
    %419 = tpu.bitcast %418 : vector<1x16xf32> -> vector<1x16xi32>
    %c-2147483648_i32_121 = arith.constant -2147483648 : i32
    %420 = vector.broadcast %c-2147483648_i32_121 : i32 to vector<1x16xi32>
    %421 = arith.andi %419, %420 : vector<1x16xi32>
    %422 = math.absf %418 : vector<1x16xf32>
    %cst_122 = arith.constant 1.000000e+00 : f32
    %423 = vector.broadcast %cst_122 : f32 to vector<1x16xf32>
    %424 = arith.addf %422, %423 : vector<1x16xf32>
    %425 = math.log %424 : vector<1x16xf32>
    %426 = tpu.bitcast %425 : vector<1x16xf32> -> vector<1x16xi32>
    %427 = arith.ori %426, %421 : vector<1x16xi32>
    %428 = tpu.bitcast %427 : vector<1x16xi32> -> vector<1x16xf32>
    %429 = vector.broadcast %416 : vector<1x16xf32> to vector<32x16xf32>
    %430 = arith.mulf %12, %429 : vector<32x16xf32>
    %431 = vector.broadcast %428 : vector<1x16xf32> to vector<32x16xf32>
    %432 = arith.mulf %15, %431 : vector<32x16xf32>
    %433 = arith.addf %430, %432 : vector<32x16xf32>
    %434 = arith.addf %433, %17 : vector<32x16xf32>
    %cst_123 = arith.constant 0.000000e+00 : f32
    %435 = vector.broadcast %cst_123 : f32 to vector<32x16xf32>
    %436 = arith.maximumf %434, %435 : vector<32x16xf32>
    %c0_124 = arith.constant 0 : index
    %c176 = arith.constant 176 : index
    %437 = vector.load %arg11[%c0_124, %c176] : memref<32x256xf32, #tpu.memory_space<vmem>>, vector<32x16xf32>
    tpu.vector_store %arg11[%c0_124, %c176], %436 {strides = array<i32>} : memref<32x256xf32, #tpu.memory_space<vmem>>, vector<32x16xf32>,
    %c12 = arith.constant 12 : index
    %c0_125 = arith.constant 0 : index
    %438 = vector.load %arg2[%c12, %c0_125] : memref<16x2xf32, #tpu.memory_space<vmem>>, vector<1x1xf32>
    %c12_126 = arith.constant 12 : index
    %c1_127 = arith.constant 1 : index
    %439 = vector.load %arg2[%c12_126, %c1_127] : memref<16x2xf32, #tpu.memory_space<vmem>>, vector<1x1xf32>
    %440 = vector.broadcast %438 : vector<1x1xf32> to vector<1x16xf32>
    %441 = arith.subf %440, %7 : vector<1x16xf32>
    %442 = tpu.bitcast %441 : vector<1x16xf32> -> vector<1x16xi32>
    %c-2147483648_i32_128 = arith.constant -2147483648 : i32
    %443 = vector.broadcast %c-2147483648_i32_128 : i32 to vector<1x16xi32>
    %444 = arith.andi %442, %443 : vector<1x16xi32>
    %445 = math.absf %441 : vector<1x16xf32>
    %cst_129 = arith.constant 1.000000e+00 : f32
    %446 = vector.broadcast %cst_129 : f32 to vector<1x16xf32>
    %447 = arith.addf %445, %446 : vector<1x16xf32>
    %448 = math.log %447 : vector<1x16xf32>
    %449 = tpu.bitcast %448 : vector<1x16xf32> -> vector<1x16xi32>
    %450 = arith.ori %449, %444 : vector<1x16xi32>
    %451 = tpu.bitcast %450 : vector<1x16xi32> -> vector<1x16xf32>
    %452 = vector.broadcast %439 : vector<1x1xf32> to vector<1x16xf32>
    %453 = arith.subf %452, %9 : vector<1x16xf32>
    %454 = tpu.bitcast %453 : vector<1x16xf32> -> vector<1x16xi32>
    %c-2147483648_i32_130 = arith.constant -2147483648 : i32
    %455 = vector.broadcast %c-2147483648_i32_130 : i32 to vector<1x16xi32>
    %456 = arith.andi %454, %455 : vector<1x16xi32>
    %457 = math.absf %453 : vector<1x16xf32>
    %cst_131 = arith.constant 1.000000e+00 : f32
    %458 = vector.broadcast %cst_131 : f32 to vector<1x16xf32>
    %459 = arith.addf %457, %458 : vector<1x16xf32>
    %460 = math.log %459 : vector<1x16xf32>
    %461 = tpu.bitcast %460 : vector<1x16xf32> -> vector<1x16xi32>
    %462 = arith.ori %461, %456 : vector<1x16xi32>
    %463 = tpu.bitcast %462 : vector<1x16xi32> -> vector<1x16xf32>
    %464 = vector.broadcast %451 : vector<1x16xf32> to vector<32x16xf32>
    %465 = arith.mulf %12, %464 : vector<32x16xf32>
    %466 = vector.broadcast %463 : vector<1x16xf32> to vector<32x16xf32>
    %467 = arith.mulf %15, %466 : vector<32x16xf32>
    %468 = arith.addf %465, %467 : vector<32x16xf32>
    %469 = arith.addf %468, %17 : vector<32x16xf32>
    %cst_132 = arith.constant 0.000000e+00 : f32
    %470 = vector.broadcast %cst_132 : f32 to vector<32x16xf32>
    %471 = arith.maximumf %469, %470 : vector<32x16xf32>
    %c0_133 = arith.constant 0 : index
    %c192 = arith.constant 192 : index
    %472 = vector.load %arg11[%c0_133, %c192] : memref<32x256xf32, #tpu.memory_space<vmem>>, vector<32x16xf32>
    tpu.vector_store %arg11[%c0_133, %c192], %471 {strides = array<i32>} : memref<32x256xf32, #tpu.memory_space<vmem>>, vector<32x16xf32>,
    %c13 = arith.constant 13 : index
    %c0_134 = arith.constant 0 : index
    %473 = vector.load %arg2[%c13, %c0_134] : memref<16x2xf32, #tpu.memory_space<vmem>>, vector<1x1xf32>
    %c13_135 = arith.constant 13 : index
    %c1_136 = arith.constant 1 : index
    %474 = vector.load %arg2[%c13_135, %c1_136] : memref<16x2xf32, #tpu.memory_space<vmem>>, vector<1x1xf32>
    %475 = vector.broadcast %473 : vector<1x1xf32> to vector<1x16xf32>
    %476 = arith.subf %475, %7 : vector<1x16xf32>
    %477 = tpu.bitcast %476 : vector<1x16xf32> -> vector<1x16xi32>
    %c-2147483648_i32_137 = arith.constant -2147483648 : i32
    %478 = vector.broadcast %c-2147483648_i32_137 : i32 to vector<1x16xi32>
    %479 = arith.andi %477, %478 : vector<1x16xi32>
    %480 = math.absf %476 : vector<1x16xf32>
    %cst_138 = arith.constant 1.000000e+00 : f32
    %481 = vector.broadcast %cst_138 : f32 to vector<1x16xf32>
    %482 = arith.addf %480, %481 : vector<1x16xf32>
    %483 = math.log %482 : vector<1x16xf32>
    %484 = tpu.bitcast %483 : vector<1x16xf32> -> vector<1x16xi32>
    %485 = arith.ori %484, %479 : vector<1x16xi32>
    %486 = tpu.bitcast %485 : vector<1x16xi32> -> vector<1x16xf32>
    %487 = vector.broadcast %474 : vector<1x1xf32> to vector<1x16xf32>
    %488 = arith.subf %487, %9 : vector<1x16xf32>
    %489 = tpu.bitcast %488 : vector<1x16xf32> -> vector<1x16xi32>
    %c-2147483648_i32_139 = arith.constant -2147483648 : i32
    %490 = vector.broadcast %c-2147483648_i32_139 : i32 to vector<1x16xi32>
    %491 = arith.andi %489, %490 : vector<1x16xi32>
    %492 = math.absf %488 : vector<1x16xf32>
    %cst_140 = arith.constant 1.000000e+00 : f32
    %493 = vector.broadcast %cst_140 : f32 to vector<1x16xf32>
    %494 = arith.addf %492, %493 : vector<1x16xf32>
    %495 = math.log %494 : vector<1x16xf32>
    %496 = tpu.bitcast %495 : vector<1x16xf32> -> vector<1x16xi32>
    %497 = arith.ori %496, %491 : vector<1x16xi32>
    %498 = tpu.bitcast %497 : vector<1x16xi32> -> vector<1x16xf32>
    %499 = vector.broadcast %486 : vector<1x16xf32> to vector<32x16xf32>
    %500 = arith.mulf %12, %499 : vector<32x16xf32>
    %501 = vector.broadcast %498 : vector<1x16xf32> to vector<32x16xf32>
    %502 = arith.mulf %15, %501 : vector<32x16xf32>
    %503 = arith.addf %500, %502 : vector<32x16xf32>
    %504 = arith.addf %503, %17 : vector<32x16xf32>
    %cst_141 = arith.constant 0.000000e+00 : f32
    %505 = vector.broadcast %cst_141 : f32 to vector<32x16xf32>
    %506 = arith.maximumf %504, %505 : vector<32x16xf32>
    %c0_142 = arith.constant 0 : index
    %c208 = arith.constant 208 : index
    %507 = vector.load %arg11[%c0_142, %c208] : memref<32x256xf32, #tpu.memory_space<vmem>>, vector<32x16xf32>
    tpu.vector_store %arg11[%c0_142, %c208], %506 {strides = array<i32>} : memref<32x256xf32, #tpu.memory_space<vmem>>, vector<32x16xf32>,
    %c14 = arith.constant 14 : index
    %c0_143 = arith.constant 0 : index
    %508 = vector.load %arg2[%c14, %c0_143] : memref<16x2xf32, #tpu.memory_space<vmem>>, vector<1x1xf32>
    %c14_144 = arith.constant 14 : index
    %c1_145 = arith.constant 1 : index
    %509 = vector.load %arg2[%c14_144, %c1_145] : memref<16x2xf32, #tpu.memory_space<vmem>>, vector<1x1xf32>
    %510 = vector.broadcast %508 : vector<1x1xf32> to vector<1x16xf32>
    %511 = arith.subf %510, %7 : vector<1x16xf32>
    %512 = tpu.bitcast %511 : vector<1x16xf32> -> vector<1x16xi32>
    %c-2147483648_i32_146 = arith.constant -2147483648 : i32
    %513 = vector.broadcast %c-2147483648_i32_146 : i32 to vector<1x16xi32>
    %514 = arith.andi %512, %513 : vector<1x16xi32>
    %515 = math.absf %511 : vector<1x16xf32>
    %cst_147 = arith.constant 1.000000e+00 : f32
    %516 = vector.broadcast %cst_147 : f32 to vector<1x16xf32>
    %517 = arith.addf %515, %516 : vector<1x16xf32>
    %518 = math.log %517 : vector<1x16xf32>
    %519 = tpu.bitcast %518 : vector<1x16xf32> -> vector<1x16xi32>
    %520 = arith.ori %519, %514 : vector<1x16xi32>
    %521 = tpu.bitcast %520 : vector<1x16xi32> -> vector<1x16xf32>
    %522 = vector.broadcast %509 : vector<1x1xf32> to vector<1x16xf32>
    %523 = arith.subf %522, %9 : vector<1x16xf32>
    %524 = tpu.bitcast %523 : vector<1x16xf32> -> vector<1x16xi32>
    %c-2147483648_i32_148 = arith.constant -2147483648 : i32
    %525 = vector.broadcast %c-2147483648_i32_148 : i32 to vector<1x16xi32>
    %526 = arith.andi %524, %525 : vector<1x16xi32>
    %527 = math.absf %523 : vector<1x16xf32>
    %cst_149 = arith.constant 1.000000e+00 : f32
    %528 = vector.broadcast %cst_149 : f32 to vector<1x16xf32>
    %529 = arith.addf %527, %528 : vector<1x16xf32>
    %530 = math.log %529 : vector<1x16xf32>
    %531 = tpu.bitcast %530 : vector<1x16xf32> -> vector<1x16xi32>
    %532 = arith.ori %531, %526 : vector<1x16xi32>
    %533 = tpu.bitcast %532 : vector<1x16xi32> -> vector<1x16xf32>
    %534 = vector.broadcast %521 : vector<1x16xf32> to vector<32x16xf32>
    %535 = arith.mulf %12, %534 : vector<32x16xf32>
    %536 = vector.broadcast %533 : vector<1x16xf32> to vector<32x16xf32>
    %537 = arith.mulf %15, %536 : vector<32x16xf32>
    %538 = arith.addf %535, %537 : vector<32x16xf32>
    %539 = arith.addf %538, %17 : vector<32x16xf32>
    %cst_150 = arith.constant 0.000000e+00 : f32
    %540 = vector.broadcast %cst_150 : f32 to vector<32x16xf32>
    %541 = arith.maximumf %539, %540 : vector<32x16xf32>
    %c0_151 = arith.constant 0 : index
    %c224 = arith.constant 224 : index
    %542 = vector.load %arg11[%c0_151, %c224] : memref<32x256xf32, #tpu.memory_space<vmem>>, vector<32x16xf32>
    tpu.vector_store %arg11[%c0_151, %c224], %541 {strides = array<i32>} : memref<32x256xf32, #tpu.memory_space<vmem>>, vector<32x16xf32>,
    %c15 = arith.constant 15 : index
    %c0_152 = arith.constant 0 : index
    %543 = vector.load %arg2[%c15, %c0_152] : memref<16x2xf32, #tpu.memory_space<vmem>>, vector<1x1xf32>
    %c15_153 = arith.constant 15 : index
    %c1_154 = arith.constant 1 : index
    %544 = vector.load %arg2[%c15_153, %c1_154] : memref<16x2xf32, #tpu.memory_space<vmem>>, vector<1x1xf32>
    %545 = vector.broadcast %543 : vector<1x1xf32> to vector<1x16xf32>
    %546 = arith.subf %545, %7 : vector<1x16xf32>
    %547 = tpu.bitcast %546 : vector<1x16xf32> -> vector<1x16xi32>
    %c-2147483648_i32_155 = arith.constant -2147483648 : i32
    %548 = vector.broadcast %c-2147483648_i32_155 : i32 to vector<1x16xi32>
    %549 = arith.andi %547, %548 : vector<1x16xi32>
    %550 = math.absf %546 : vector<1x16xf32>
    %cst_156 = arith.constant 1.000000e+00 : f32
    %551 = vector.broadcast %cst_156 : f32 to vector<1x16xf32>
    %552 = arith.addf %550, %551 : vector<1x16xf32>
    %553 = math.log %552 : vector<1x16xf32>
    %554 = tpu.bitcast %553 : vector<1x16xf32> -> vector<1x16xi32>
    %555 = arith.ori %554, %549 : vector<1x16xi32>
    %556 = tpu.bitcast %555 : vector<1x16xi32> -> vector<1x16xf32>
    %557 = vector.broadcast %544 : vector<1x1xf32> to vector<1x16xf32>
    %558 = arith.subf %557, %9 : vector<1x16xf32>
    %559 = tpu.bitcast %558 : vector<1x16xf32> -> vector<1x16xi32>
    %c-2147483648_i32_157 = arith.constant -2147483648 : i32
    %560 = vector.broadcast %c-2147483648_i32_157 : i32 to vector<1x16xi32>
    %561 = arith.andi %559, %560 : vector<1x16xi32>
    %562 = math.absf %558 : vector<1x16xf32>
    %cst_158 = arith.constant 1.000000e+00 : f32
    %563 = vector.broadcast %cst_158 : f32 to vector<1x16xf32>
    %564 = arith.addf %562, %563 : vector<1x16xf32>
    %565 = math.log %564 : vector<1x16xf32>
    %566 = tpu.bitcast %565 : vector<1x16xf32> -> vector<1x16xi32>
    %567 = arith.ori %566, %561 : vector<1x16xi32>
    %568 = tpu.bitcast %567 : vector<1x16xi32> -> vector<1x16xf32>
    %569 = vector.broadcast %556 : vector<1x16xf32> to vector<32x16xf32>
    %570 = arith.mulf %12, %569 : vector<32x16xf32>
    %571 = vector.broadcast %568 : vector<1x16xf32> to vector<32x16xf32>
    %572 = arith.mulf %15, %571 : vector<32x16xf32>
    %573 = arith.addf %570, %572 : vector<32x16xf32>
    %574 = arith.addf %573, %17 : vector<32x16xf32>
    %cst_159 = arith.constant 0.000000e+00 : f32
    %575 = vector.broadcast %cst_159 : f32 to vector<32x16xf32>
    %576 = arith.maximumf %574, %575 : vector<32x16xf32>
    %c0_160 = arith.constant 0 : index
    %c240 = arith.constant 240 : index
    %577 = vector.load %arg11[%c0_160, %c240] : memref<32x256xf32, #tpu.memory_space<vmem>>, vector<32x16xf32>
    tpu.vector_store %arg11[%c0_160, %c240], %576 {strides = array<i32>} : memref<32x256xf32, #tpu.memory_space<vmem>>, vector<32x16xf32>,
    %c0_161 = arith.constant 0 : index
    %c0_162 = arith.constant 0 : index
    %578 = vector.load %arg11[%c0_161, %c0_162] : memref<32x256xf32, #tpu.memory_space<vmem>>, vector<32x256xf32>
    %579 = arith.truncf %1 : vector<32x32xf32> to vector<32x32xbf16>
    %580 = arith.truncf %578 : vector<32x256xf32> to vector<32x256xbf16>
    %cst_163 = arith.constant dense<0.000000e+00> : vector<32x256xf32>
    %581 = tpu.matmul %579, %580, %cst_163 {dimension_numbers = #tpu.dot_dimension_numbers<[1], [0], [0], [1], [0, 0, 1, 1], [], []>} : vector<32x32xbf16>, vector<32x256xbf16>, vector<32x256xf32> -> vector<32x256xf32>
    %582 = vector.broadcast %4 : vector<32x1xf32> to vector<32x256xf32>
    %583 = arith.addf %581, %582 : vector<32x256xf32>
    %cst_164 = arith.constant 0.000000e+00 : f32
    %584 = vector.broadcast %cst_164 : f32 to vector<32x256xf32>
    %585 = arith.maximumf %583, %584 : vector<32x256xf32>
    %586 = arith.truncf %2 : vector<4x32xf32> to vector<4x32xbf16>
    %587 = arith.truncf %585 : vector<32x256xf32> to vector<32x256xbf16>
    %cst_165 = arith.constant dense<0.000000e+00> : vector<4x256xf32>
    %588 = tpu.matmul %586, %587, %cst_165 {dimension_numbers = #tpu.dot_dimension_numbers<[1], [0], [0], [1], [0, 0, 1, 1], [], []>} : vector<4x32xbf16>, vector<32x256xbf16>, vector<4x256xf32> -> vector<4x256xf32>
    %589 = vector.broadcast %5 : vector<4x1xf32> to vector<4x256xf32>
    %590 = arith.addf %588, %589 : vector<4x256xf32>
    %c0_166 = arith.constant 0 : index
    %c0_167 = arith.constant 0 : index
    %c0_168 = arith.constant 0 : index
    %591 = vector.load %arg10[%c0_166, %c0_167, %c0_168] : memref<1x4x256xf32, #tpu.memory_space<vmem>>, vector<1x4x256xf32>
    %592 = vector.shape_cast %591 : vector<1x4x256xf32> to vector<4x256xf32>
    %593 = vector.shape_cast %590 : vector<4x256xf32> to vector<1x4x256xf32>
    tpu.vector_store %arg10[%c0_166, %c0_167, %c0_168], %593 {strides = array<i32>} : memref<1x4x256xf32, #tpu.memory_space<vmem>>, vector<1x4x256xf32>,
    return
  }
  func.func @transform_0(%arg0: i32, %arg1: i32) -> (i32, i32) {
    %c0_i32 = arith.constant 0 : i32
    %c0_i32_0 = arith.constant 0 : i32
    return %arg1, %c0_i32 : i32, i32
  }
  func.func @transform_1(%arg0: i32, %arg1: i32) -> (i32, i32, i32) {
    %c0_i32 = arith.constant 0 : i32
    %c0_i32_0 = arith.constant 0 : i32
    %c0_i32_1 = arith.constant 0 : i32
    return %arg0, %c0_i32, %c0_i32_0 : i32, i32, i32
  }
  func.func @transform_2(%arg0: i32, %arg1: i32) -> (i32, i32) {
    %c0_i32 = arith.constant 0 : i32
    %c0_i32_0 = arith.constant 0 : i32
    %c0_i32_1 = arith.constant 0 : i32
    return %c0_i32, %c0_i32_0 : i32, i32
  }
  func.func @transform_3(%arg0: i32, %arg1: i32) -> (i32, i32) {
    %c0_i32 = arith.constant 0 : i32
    %c0_i32_0 = arith.constant 0 : i32
    %c0_i32_1 = arith.constant 0 : i32
    return %c0_i32, %c0_i32_0 : i32, i32
  }
  func.func @transform_4(%arg0: i32, %arg1: i32) -> (i32, i32) {
    %c0_i32 = arith.constant 0 : i32
    %c0_i32_0 = arith.constant 0 : i32
    %c0_i32_1 = arith.constant 0 : i32
    return %c0_i32, %c0_i32_0 : i32, i32
  }
  func.func @transform_5(%arg0: i32, %arg1: i32) -> (i32, i32) {
    %c0_i32 = arith.constant 0 : i32
    %c0_i32_0 = arith.constant 0 : i32
    %c0_i32_1 = arith.constant 0 : i32
    return %c0_i32, %c0_i32_0 : i32, i32
  }
  func.func @transform_6(%arg0: i32, %arg1: i32) -> (i32, i32) {
    %c0_i32 = arith.constant 0 : i32
    %c0_i32_0 = arith.constant 0 : i32
    %c0_i32_1 = arith.constant 0 : i32
    return %c0_i32, %c0_i32_0 : i32, i32
  }
  func.func @transform_7(%arg0: i32, %arg1: i32) -> (i32, i32) {
    %c0_i32 = arith.constant 0 : i32
    %c0_i32_0 = arith.constant 0 : i32
    %c0_i32_1 = arith.constant 0 : i32
    return %c0_i32, %c0_i32_0 : i32, i32
  }
  func.func @transform_8(%arg0: i32, %arg1: i32) -> (i32, i32, i32) {
    %c0_i32 = arith.constant 0 : i32
    %c0_i32_0 = arith.constant 0 : i32
    return %arg0, %c0_i32, %arg1 : i32, i32, i32
  }
}

</mosaic_0001>

<llo_original>
// kernel: fwd.1
$region0: #{fwd.1}
  #allocation0 [shape = 'u32[]', space=smem, size = 0x4, offset = 0x4, fixed_abs, tag = 'smem constant byte address 0x4 - core index']
  #allocation1 [shape = 'u32[144,128]{1,0:T(1,128)}', space=vmem, size = 0x12000, scoped, tag = 'internal scratch']
  #allocation2 [shape = 'f32[32,256]{1,0:T(8,128)}', space=vmem, size = 0x8000, scoped, tag = 'scratch operand']
  %s0 = inlined_call_operand.vmem [shape: f32[16,2], index: 0, kind: input, shape index: {}]
  %s1 = inlined_call_operand.vmem [shape: f32[4,2,16], index: 1, kind: input, shape index: {}]
  %s2 = inlined_call_operand.vmem [shape: f32[32,2], index: 2, kind: input, shape index: {}]
  %s3 = inlined_call_operand.vmem [shape: f32[32,1], index: 3, kind: input, shape index: {}]
  %s4 = inlined_call_operand.vmem [shape: f32[32,32], index: 4, kind: input, shape index: {}]
  %s5 = inlined_call_operand.vmem [shape: f32[32,1], index: 5, kind: input, shape index: {}]
  %s6 = inlined_call_operand.vmem [shape: f32[4,32], index: 6, kind: input, shape index: {}]
  %s7 = inlined_call_operand.vmem [shape: f32[4,1], index: 7, kind: input, shape index: {}]
  %s8 = inlined_call_operand.vmem [shape: f32[4,4,256], index: 8, kind: output, shape index: {}]
  %s9 = sld [smem:[#allocation0]]
  $region65: #{fwd.1} parent=0
    _
  %s11 = ssub.s32 1, %s9
  %s12 = scalar_select 0, %s11, %s9
  loop: start=0, step=1, limit=6
  $region2: #{fwd.1} parent=0 // loop_pre_header
    _
  $region3: #{fwd.1} parent=0 // loop_header
    %s14 = sphi 0, %s18
    %p15 = scmp.ge.s32.totalorder %s14, 6
    %s21 = sphi 0, %s33
    %s22 = sphi 0, %s29
    %s23 = sphi 0, %s21
    %s24 = sphi 0, %s22
    %s25 = sphi 0, %s23
    %s26 = sphi 0, %s24
    %s36 = sphi 0, %s38
    %s39 = sphi 0, %s36
    %s40 = sphi 0, %s39
    %s56 = sphi 0, %s40
    %s62 = sphi 0, %s64
    %s65 = sphi 0, %s62
    %s66 = sphi 0, %s65
    %s82 = sphi 0, %s66
    %s86 = sphi 0, %s86
    %s88 = sphi 0, %s86
    %s89 = sphi 0, %s88
    %s103 = sphi 0, %s89
    %s107 = sphi 0, %s107
    %s109 = sphi 0, %s107
    %s110 = sphi 0, %s109
    %s124 = sphi 0, %s110
    %s128 = sphi 0, %s128
    %s130 = sphi 0, %s128
    %s131 = sphi 0, %s130
    %s145 = sphi 0, %s131
    %s149 = sphi 0, %s149
    %s151 = sphi 0, %s149
    %s152 = sphi 0, %s151
    %s166 = sphi 0, %s152
    %s170 = sphi 0, %s170
    %s172 = sphi 0, %s170
    %s173 = sphi 0, %s172
    %s187 = sphi 0, %s173
    %s191 = sphi 0, %s191
    %s193 = sphi 0, %s191
    %s194 = sphi 0, %s193
    %s208 = sphi 0, %s194
    %s216 = sphi 0, %s218
    %s219 = sphi 0, %s216
    %s220 = sphi 0, %s219
    %s236 = sphi 0, %s220
  $region4: #{fwd.1} parent=0 // loop_header_branch
    %17 = sbr.rel (%p15) target = $region8
  $region5: #{fwd.1} parent=0 // loop_body
    %s19 = ssub.s32 %s14, 1
    %s20 = ssub.s32 %s14, 2
    %s27 = sadd.s32 1, %s22
    %p28 = scmp.ge.s32.totalorder %s27, 1
    %s29 = scalar_select %p28, 0, %s27
    %s30 = sadd.s32 1, %s21
    %s31 = scalar_select %p28, %s30, %s21
    %p32 = scmp.ge.s32.totalorder %s31, 4
    %s33 = scalar_select %p32, 0, %s31
    %s34 = ssub.s32 %s22, %s29
    %p35 = scmp.eq.s32.totalorder %s34, 0
    %s37 = sadd.s32 %s36, 1
    %s38 = scalar_select %p35, %s36, %s37
    %p41 = pneg %p35
    %p42 = scmp.eq.s32.totalorder %s14, 3
    %p43 = por %p41, %p42
    %p44 = scmp.ne.s32.totalorder %s36, %s39
    %p45 = scmp.eq.s32.totalorder %s14, 0
    %p46 = por %p44, %p45
    %p47 = scmp.ne.s32.totalorder %s36, %s39
    %p48 = scmp.eq.s32.totalorder %s19, 3
    %p49 = por %p47, %p48
    %p50 = scmp.ne.s32.totalorder %s39, %s40
    %p51 = scmp.eq.s32.totalorder %s19, 0
    %p52 = por %p50, %p51
    %p53 = scmp.ne.s32.totalorder %s39, %s40
    %p54 = scmp.eq.s32.totalorder %s20, 3
    %p55 = por %p53, %p54
    %p57 = scmp.ne.s32.totalorder %s40, %s56
    %p58 = scmp.eq.s32.totalorder %s20, 0
    %p59 = por %p57, %p58
    %s60 = ssub.s32 %s21, %s33
    %p61 = scmp.eq.s32.totalorder %s60, 0
    %s63 = sadd.s32 %s62, 1
    %s64 = scalar_select %p61, %s62, %s63
    %p67 = pneg %p61
    %p68 = scmp.eq.s32.totalorder %s14, 3
    %p69 = por %p67, %p68
    %p70 = scmp.ne.s32.totalorder %s62, %s65
    %p71 = scmp.eq.s32.totalorder %s14, 0
    %p72 = por %p70, %p71
    %p73 = scmp.ne.s32.totalorder %s62, %s65
    %p74 = scmp.eq.s32.totalorder %s19, 3
    %p75 = por %p73, %p74
    %p76 = scmp.ne.s32.totalorder %s65, %s66
    %p77 = scmp.eq.s32.totalorder %s19, 0
    %p78 = por %p76, %p77
    %p79 = scmp.ne.s32.totalorder %s65, %s66
    %p80 = scmp.eq.s32.totalorder %s20, 3
    %p81 = por %p79, %p80
    %p83 = scmp.ne.s32.totalorder %s66, %s82
    %p84 = scmp.eq.s32.totalorder %s20, 0
    %p85 = por %p83, %p84
    %s87 = sadd.s32 %s86, 1
    %p90 = scmp.eq.s32.totalorder %s14, 3
    %p91 = scmp.ne.s32.totalorder %s86, %s88
    %p92 = scmp.eq.s32.totalorder %s14, 0
    %p93 = por %p91, %p92
    %p94 = scmp.ne.s32.totalorder %s86, %s88
    %p95 = scmp.eq.s32.totalorder %s19, 3
    %p96 = por %p94, %p95
    %p97 = scmp.ne.s32.totalorder %s88, %s89
    %p98 = scmp.eq.s32.totalorder %s19, 0
    %p99 = por %p97, %p98
    %p100 = scmp.ne.s32.totalorder %s88, %s89
    %p101 = scmp.eq.s32.totalorder %s20, 3
    %p102 = por %p100, %p101
    %p104 = scmp.ne.s32.totalorder %s89, %s103
    %p105 = scmp.eq.s32.totalorder %s20, 0
    %p106 = por %p104, %p105
    %s108 = sadd.s32 %s107, 1
    %p111 = scmp.eq.s32.totalorder %s14, 3
    %p112 = scmp.ne.s32.totalorder %s107, %s109
    %p113 = scmp.eq.s32.totalorder %s14, 0
    %p114 = por %p112, %p113
    %p115 = scmp.ne.s32.totalorder %s107, %s109
    %p116 = scmp.eq.s32.totalorder %s19, 3
    %p117 = por %p115, %p116
    %p118 = scmp.ne.s32.totalorder %s109, %s110
    %p119 = scmp.eq.s32.totalorder %s19, 0
    %p120 = por %p118, %p119
    %p121 = scmp.ne.s32.totalorder %s109, %s110
    %p122 = scmp.eq.s32.totalorder %s20, 3
    %p123 = por %p121, %p122
    %p125 = scmp.ne.s32.totalorder %s110, %s124
    %p126 = scmp.eq.s32.totalorder %s20, 0
    %p127 = por %p125, %p126
    %s129 = sadd.s32 %s128, 1
    %p132 = scmp.eq.s32.totalorder %s14, 3
    %p133 = scmp.ne.s32.totalorder %s128, %s130
    %p134 = scmp.eq.s32.totalorder %s14, 0
    %p135 = por %p133, %p134
    %p136 = scmp.ne.s32.totalorder %s128, %s130
    %p137 = scmp.eq.s32.totalorder %s19, 3
    %p138 = por %p136, %p137
    %p139 = scmp.ne.s32.totalorder %s130, %s131
    %p140 = scmp.eq.s32.totalorder %s19, 0
    %p141 = por %p139, %p140
    %p142 = scmp.ne.s32.totalorder %s130, %s131
    %p143 = scmp.eq.s32.totalorder %s20, 3
    %p144 = por %p142, %p143
    %p146 = scmp.ne.s32.totalorder %s131, %s145
    %p147 = scmp.eq.s32.totalorder %s20, 0
    %p148 = por %p146, %p147
    %s150 = sadd.s32 %s149, 1
    %p153 = scmp.eq.s32.totalorder %s14, 3
    %p154 = scmp.ne.s32.totalorder %s149, %s151
    %p155 = scmp.eq.s32.totalorder %s14, 0
    %p156 = por %p154, %p155
    %p157 = scmp.ne.s32.totalorder %s149, %s151
    %p158 = scmp.eq.s32.totalorder %s19, 3
    %p159 = por %p157, %p158
    %p160 = scmp.ne.s32.totalorder %s151, %s152
    %p161 = scmp.eq.s32.totalorder %s19, 0
    %p162 = por %p160, %p161
    %p163 = scmp.ne.s32.totalorder %s151, %s152
    %p164 = scmp.eq.s32.totalorder %s20, 3
    %p165 = por %p163, %p164
    %p167 = scmp.ne.s32.totalorder %s152, %s166
    %p168 = scmp.eq.s32.totalorder %s20, 0
    %p169 = por %p167, %p168
    %s171 = sadd.s32 %s170, 1
    %p174 = scmp.eq.s32.totalorder %s14, 3
    %p175 = scmp.ne.s32.totalorder %s170, %s172
    %p176 = scmp.eq.s32.totalorder %s14, 0
    %p177 = por %p175, %p176
    %p178 = scmp.ne.s32.totalorder %s170, %s172
    %p179 = scmp.eq.s32.totalorder %s19, 3
    %p180 = por %p178, %p179
    %p181 = scmp.ne.s32.totalorder %s172, %s173
    %p182 = scmp.eq.s32.totalorder %s19, 0
    %p183 = por %p181, %p182
    %p184 = scmp.ne.s32.totalorder %s172, %s173
    %p185 = scmp.eq.s32.totalorder %s20, 3
    %p186 = por %p184, %p185
    %p188 = scmp.ne.s32.totalorder %s173, %s187
    %p189 = scmp.eq.s32.totalorder %s20, 0
    %p190 = por %p188, %p189
    %s192 = sadd.s32 %s191, 1
    %p195 = scmp.eq.s32.totalorder %s14, 3
    %p196 = scmp.ne.s32.totalorder %s191, %s193
    %p197 = scmp.eq.s32.totalorder %s14, 0
    %p198 = por %p196, %p197
    %p199 = scmp.ne.s32.totalorder %s191, %s193
    %p200 = scmp.eq.s32.totalorder %s19, 3
    %p201 = por %p199, %p200
    %p202 = scmp.ne.s32.totalorder %s193, %s194
    %p203 = scmp.eq.s32.totalorder %s19, 0
    %p204 = por %p202, %p203
    %p205 = scmp.ne.s32.totalorder %s193, %s194
    %p206 = scmp.eq.s32.totalorder %s20, 3
    %p207 = por %p205, %p206
    %p209 = scmp.ne.s32.totalorder %s194, %s208
    %p210 = scmp.eq.s32.totalorder %s20, 0
    %p211 = por %p209, %p210
    %s212 = ssub.s32 %s21, %s33
    %s213 = ssub.s32 %s22, %s29
    %s214 = sor.u32 %s212, %s213
    %p215 = scmp.eq.s32.totalorder %s214, 0
    %s217 = sadd.s32 %s216, 1
    %s218 = scalar_select %p215, %s216, %s217
    %p221 = pneg %p215
    %p222 = scmp.eq.s32.totalorder %s14, 3
    %p223 = por %p221, %p222
    %p224 = scmp.ne.s32.totalorder %s216, %s219
    %p225 = scmp.eq.s32.totalorder %s14, 0
    %p226 = por %p224, %p225
    %p227 = scmp.ne.s32.totalorder %s216, %s219
    %p228 = scmp.eq.s32.totalorder %s19, 3
    %p229 = por %p227, %p228
    %p230 = scmp.ne.s32.totalorder %s219, %s220
    %p231 = scmp.eq.s32.totalorder %s19, 0
    %p232 = por %p230, %p231
    %p233 = scmp.ne.s32.totalorder %s219, %s220
    %p234 = scmp.eq.s32.totalorder %s20, 3
    %p235 = por %p233, %p234
    %p237 = scmp.ne.s32.totalorder %s220, %s236
    %p238 = scmp.eq.s32.totalorder %s20, 0
    %p239 = por %p237, %p238
    %p240 = scmp.le.s32.totalorder 1, %s14
    %p241 = scmp.lt.s32.totalorder %s14, 5
    %p242 = pnand %p240, %p241
    %p243 = pneg %p242
    // Predicated region
    $region9: #{fwd.1} parent=5 // pred_check
      _
    $region10: #{fwd.1} parent=5 // pred_check_branch
      %245 = sbr.rel (%p242) target = $region12
    $region11: #{fwd.1} parent=5 // pred_region
      %s246 = ssub.s32 %s14, 1
      // Predicated region
      $region13: #{fwd.1} parent=11 // pred_check
        %p247 = pneg %p52
      $region14: #{fwd.1} parent=11 // pred_check_branch
        %249 = sbr.rel (%p247) target = $region16
      $region15: #{fwd.1} parent=11 // pred_region
        %s250 = smul.u32 2, %s24
        %p251 = scmp.lt.s32.totalorder %s250, 1
        %s252 = scalar_select %p251, %s250, 1
        %s253 = smul.addr %s252, 8
        %s254 = scalar_lea.vmem %s0, %s253
        %s255 = smul.u32 2, %s24
      $region16: #{fwd.1} parent=11 // pred_fallthru
        _
      // Predicated region
      $region17: #{fwd.1} parent=11 // pred_check
        %p256 = pneg %p99
      $region18: #{fwd.1} parent=11 // pred_check_branch
        %258 = sbr.rel (%p256) target = $region20
      $region19: #{fwd.1} parent=11 // pred_region
        _
      $region20: #{fwd.1} parent=11 // pred_fallthru
        _
      // Predicated region
      $region21: #{fwd.1} parent=11 // pred_check
        %p259 = pneg %p120
      $region22: #{fwd.1} parent=11 // pred_check_branch
        %261 = sbr.rel (%p259) target = $region24
      $region23: #{fwd.1} parent=11 // pred_region
        _
      $region24: #{fwd.1} parent=11 // pred_fallthru
        _
      // Predicated region
      $region25: #{fwd.1} parent=11 // pred_check
        %p262 = pneg %p141
      $region26: #{fwd.1} parent=11 // pred_check_branch
        %264 = sbr.rel (%p262) target = $region28
      $region27: #{fwd.1} parent=11 // pred_region
        _
      $region28: #{fwd.1} parent=11 // pred_fallthru
        _
      // Predicated region
      $region29: #{fwd.1} parent=11 // pred_check
        %p265 = pneg %p162
      $region30: #{fwd.1} parent=11 // pred_check_branch
        %267 = sbr.rel (%p265) target = $region32
      $region31: #{fwd.1} parent=11 // pred_region
        _
      $region32: #{fwd.1} parent=11 // pred_fallthru
        _
      // Predicated region
      $region33: #{fwd.1} parent=11 // pred_check
        %p268 = pneg %p183
      $region34: #{fwd.1} parent=11 // pred_check_branch
        %270 = sbr.rel (%p268) target = $region36
      $region35: #{fwd.1} parent=11 // pred_region
        _
      $region36: #{fwd.1} parent=11 // pred_fallthru
        _
      // Predicated region
      $region37: #{fwd.1} parent=11 // pred_check
        %p271 = pneg %p204
      $region38: #{fwd.1} parent=11 // pred_check_branch
        %273 = sbr.rel (%p271) target = $region40
      $region39: #{fwd.1} parent=11 // pred_region
        _
      $region40: #{fwd.1} parent=11 // pred_fallthru
        _
    $region12: #{fwd.1} parent=5 // pred_fallthru
      _
    %p274 = scmp.lt.s32.totalorder %s14, 4
    // Predicated region
    $region41: #{fwd.1} parent=5 // pred_check
      %p275 = pneg %p274
    $region42: #{fwd.1} parent=5 // pred_check_branch
      %277 = sbr.rel (%p275) target = $region44
    $region43: #{fwd.1} parent=5 // pred_region
      // Predicated region
      $region45: #{fwd.1} parent=43 // pred_check
        %p278 = pneg %p72
      $region46: #{fwd.1} parent=43 // pred_check_branch
        %280 = sbr.rel (%p278) target = $region48
      $region47: #{fwd.1} parent=43 // pred_region
        %p281 = scmp.lt.s32.totalorder %s21, 3
        %s282 = scalar_select %p281, %s21, 3
        %s283 = smul.addr %s282, 2
        %s284 = scalar_lea.vmem %s1, %s283
      $region48: #{fwd.1} parent=43 // pred_fallthru
        _
    $region44: #{fwd.1} parent=5 // pred_fallthru
      _
    %p285 = scmp.le.s32.totalorder 1, %s14
    %p286 = scmp.lt.s32.totalorder %s14, 5
    %p287 = pnand %p285, %p286
    %p288 = pneg %p287
    // Predicated region
    $region49: #{fwd.1} parent=5 // pred_check
      _
    $region50: #{fwd.1} parent=5 // pred_check_branch
      %290 = sbr.rel (%p287) target = $region52
    $region51: #{fwd.1} parent=5 // pred_region
      %s291 = ssub.s32 %s14, 1
      %s292 = smul.u32 2, %s24
      %p293 = scmp.lt.s32.totalorder %s292, 1
      %s294 = scalar_select %p293, %s292, 1
      %s295 = smul.addr %s294, 8
      %s296 = scalar_lea.vmem %s0, %s295
      %p297 = pneg %p52
      %p298 = pneg %p49
      %p299 = scmp.lt.s32.totalorder %s23, 3
      %s300 = scalar_select %p299, %s23, 3
      %s301 = smul.addr %s300, 2
      %s302 = scalar_lea.vmem %s1, %s301
      %p303 = pneg %p78
      %p304 = pneg %p75
      %p305 = pneg %p99
      %p306 = pneg %p96
      %p307 = pneg %p120
      %p308 = pneg %p117
      %p309 = pneg %p141
      %p310 = pneg %p138
      %p311 = pneg %p162
      %p312 = pneg %p159
      %p313 = pneg %p183
      %p314 = pneg %p180
      %p315 = pneg %p204
      %p316 = pneg %p201
      %p317 = pneg %p232
      %p318 = pneg %p229
      %s319 = smul.u32 2, %s24
      %p320 = scmp.lt.s32.totalorder %s23, 3
      %s321 = scalar_select %p320, %s23, 3
      %p322 = scmp.lt.s32.totalorder %s319, 1
      %s323 = scalar_select %p322, %s319, 1
      %s324 = smul.addr %s321, 2
      %s325 = sadd.s32 %s323, %s324
      %s326 = smul.addr %s325, 4
      %s327 = scalar_lea.vmem %s8, %s326
      %s328 = smul.u32 2, %s24
      %p329 = scmp.lt.s32.totalorder %s328, 1
      %s330 = scalar_select %p329, %s328, 1
      %s331 = smul.addr %s330, 8
      %s332 = scalar_lea.vmem %s0, %s331
      %s333 = smul.u32 2, %s24
      %p334 = scmp.lt.s32.totalorder %s23, 3
      %s335 = scalar_select %p334, %s23, 3
      %s336 = smul.addr %s335, 2
      %s337 = scalar_lea.vmem %s1, %s336
      %s338 = smul.u32 2, %s24
      %p339 = scmp.lt.s32.totalorder %s23, 3
      %s340 = scalar_select %p339, %s23, 3
      %p341 = scmp.lt.s32.totalorder %s338, 1
      %s342 = scalar_select %p341, %s338, 1
      %s343 = smul.addr %s340, 2
      %s344 = sadd.s32 %s342, %s343
      %s345 = smul.addr %s344, 4
      %s346 = scalar_lea.vmem %s8, %s345
      %s347 = smul.u32 2, %s24
      %v349 = vld [vmem:[%s2] sm:$0xff]
      %v350 = vld [vmem:[%s2 + $0x8] sm:$0xff]
      %v351 = vld [vmem:[%s2 + $0x10] sm:$0xff]
      %v352 = vld [vmem:[%s2 + $0x18] sm:$0xff]
      %v353 = vld [vmem:[%s4] sm:$0xff]
      %v354 = vld [vmem:[%s4 + $0x8] sm:$0xff]
      %v355 = vld [vmem:[%s4 + $0x10] sm:$0xff]
      %v356 = vld [vmem:[%s4 + $0x18] sm:$0xff]
      %v357 = vld [vmem:[%s6] sm:$0xf]
      %v358 = vld [vmem:[%s3] sm:$0xff]
      %v359 = vld [vmem:[%s3 + $0x8] sm:$0xff]
      %v360 = vld [vmem:[%s3 + $0x10] sm:$0xff]
      %v361 = vld [vmem:[%s3 + $0x18] sm:$0xff]
      %v362 = vld [vmem:[%s5] sm:$0xff]
      %v363 = vld [vmem:[%s5 + $0x8] sm:$0xff]
      %v364 = vld [vmem:[%s5 + $0x10] sm:$0xff]
      %v365 = vld [vmem:[%s5 + $0x18] sm:$0xff]
      %v366 = vld [vmem:[%s7] sm:$0xf]
      %v367 = vld [vmem:[%s337] sm:$0x1]
      %v368 = vld [vmem:[%s337 + $0x1] sm:$0x1]
      %370 = vset.pattern.permute.xlu0 0
      %371 = vperm.xlu0 %370, %v349
      %v372 = vpop.permute.xlu0 %371
      %375 = vset.pattern.permute.xlu0 0
      %376 = vperm.xlu0 %375, %v350
      %v377 = vpop.permute.xlu0 %376
      %380 = vset.pattern.permute.xlu0 0
      %381 = vperm.xlu0 %380, %v351
      %v382 = vpop.permute.xlu0 %381
      %385 = vset.pattern.permute.xlu0 0
      %386 = vperm.xlu0 %385, %v352
      %v387 = vpop.permute.xlu0 %386
      %389 = vset.pattern.permute.xlu0 1
      %390 = vperm.xlu0 %389, %v349
      %v391 = vpop.permute.xlu0 %390
      %393 = vset.pattern.permute.xlu0 1
      %394 = vperm.xlu0 %393, %v350
      %v395 = vpop.permute.xlu0 %394
      %397 = vset.pattern.permute.xlu0 1
      %398 = vperm.xlu0 %397, %v351
      %v399 = vpop.permute.xlu0 %398
      %401 = vset.pattern.permute.xlu0 1
      %402 = vperm.xlu0 %401, %v352
      %v403 = vpop.permute.xlu0 %402
      %406 = vset.pattern.permute.xlu0 0
      %407 = vperm.xlu0 %406, %v358
      %v408 = vpop.permute.xlu0 %407
      %411 = vset.pattern.permute.xlu0 0
      %412 = vperm.xlu0 %411, %v359
      %v413 = vpop.permute.xlu0 %412
      %416 = vset.pattern.permute.xlu0 0
      %417 = vperm.xlu0 %416, %v360
      %v418 = vpop.permute.xlu0 %417
      %421 = vset.pattern.permute.xlu0 0
      %422 = vperm.xlu0 %421, %v361
      %v423 = vpop.permute.xlu0 %422
      %v425 = vld [vmem:[%s332] sm:$0x1]
      %427 = vset.pattern.permute.xlu0 0
      %428 = vperm.xlu0 %427, %v425
      %v429 = vpop.permute.xlu0 %428
      %v431 = vsub.f32 %v429, %v367
      %v433 = vand.u32 %v431, 2147483648
      %v434 = vand.u32 2147483647, %v431
      %v435 = vadd.f32 %v434, 1.0
      %v436 = vlog2.pop %v435
      %v437 = vmul.f32 %v436, 0.6931472
      %v439 = vor.u32 %v437, %v433
      %441 = vset.pattern.permute.xlu0 1
      %442 = vperm.xlu0 %441, %v425
      %v443 = vpop.permute.xlu0 %442
      %v445 = vsub.f32 %v443, %v368
      %v447 = vand.u32 %v445, 2147483648
      %v448 = vand.u32 2147483647, %v445
      %v449 = vadd.f32 %v448, 1.0
      %v450 = vlog2.pop %v449
      %v451 = vmul.f32 %v450, 0.6931472
      %v453 = vor.u32 %v451, %v447
      %v455 = vlaneseq
      %v456 = vshrl.u32 %v455, 7
      %v457 = vsub.s32 0, %v456
      %v458 = vrot.slane %v439, %v457
      %v459 = vmul.f32 %v372, %v458
      %v460 = vmul.f32 %v377, %v458
      %v461 = vmul.f32 %v382, %v458
      %v462 = vmul.f32 %v387, %v458
      %v463 = vlaneseq
      %v464 = vshrl.u32 %v463, 7
      %v465 = vsub.s32 0, %v464
      %v466 = vrot.slane %v453, %v465
      %v467 = vmul.f32 %v391, %v466
      %v468 = vmul.f32 %v395, %v466
      %v469 = vmul.f32 %v399, %v466
      %v470 = vmul.f32 %v403, %v466
      %v471 = vadd.f32 %v459, %v467
      %v472 = vadd.f32 %v460, %v468
      %v473 = vadd.f32 %v461, %v469
      %v474 = vadd.f32 %v462, %v470
      %v475 = vadd.f32 %v471, %v408
      %v476 = vadd.f32 %v472, %v413
      %v477 = vadd.f32 %v473, %v418
      %v478 = vadd.f32 %v474, %v423
      %v479 = vmax.f32 %v475, 0.0
      %v480 = vmax.f32 %v476, 0.0
      %v481 = vmax.f32 %v477, 0.0
      %v482 = vmax.f32 %v478, 0.0
      %vm483 = vcmask 130048
      %484 = vst.msk [vmem:[#allocation2] sm:$0xff] %vm483, %v479
      %485 = vst.msk [vmem:[#allocation2 + $0x10] sm:$0xff] %vm483, %v480
      %486 = vst.msk [vmem:[#allocation2 + $0x20] sm:$0xff] %vm483, %v481
      %487 = vst.msk [vmem:[#allocation2 + $0x30] sm:$0xff] %vm483, %v482
      %v488 = vld [vmem:[%s332 + $0x1] sm:$0x1]
      %490 = vset.pattern.permute.xlu0 0
      %491 = vperm.xlu0 %490, %v488
      %v492 = vpop.permute.xlu0 %491
      %v494 = vsub.f32 %v492, %v367
      %v496 = vand.u32 %v494, 2147483648
      %v497 = vand.u32 2147483647, %v494
      %v498 = vadd.f32 %v497, 1.0
      %v499 = vlog2.pop %v498
      %v500 = vmul.f32 %v499, 0.6931472
      %v502 = vor.u32 %v500, %v496
      %504 = vset.pattern.permute.xlu0 1
      %505 = vperm.xlu0 %504, %v488
      %v506 = vpop.permute.xlu0 %505
      %v508 = vsub.f32 %v506, %v368
      %v510 = vand.u32 %v508, 2147483648
      %v511 = vand.u32 2147483647, %v508
      %v512 = vadd.f32 %v511, 1.0
      %v513 = vlog2.pop %v512
      %v514 = vmul.f32 %v513, 0.6931472
      %v516 = vor.u32 %v514, %v510
      %v518 = vlaneseq
      %v519 = vshrl.u32 %v518, 7
      %v520 = vsub.s32 0, %v519
      %v521 = vrot.slane %v502, %v520
      %v522 = vmul.f32 %v372, %v521
      %v523 = vmul.f32 %v377, %v521
      %v524 = vmul.f32 %v382, %v521
      %v525 = vmul.f32 %v387, %v521
      %v526 = vlaneseq
      %v527 = vshrl.u32 %v526, 7
      %v528 = vsub.s32 0, %v527
      %v529 = vrot.slane %v516, %v528
      %v530 = vmul.f32 %v391, %v529
      %v531 = vmul.f32 %v395, %v529
      %v532 = vmul.f32 %v399, %v529
      %v533 = vmul.f32 %v403, %v529
      %v534 = vadd.f32 %v522, %v530
      %v535 = vadd.f32 %v523, %v531
      %v536 = vadd.f32 %v524, %v532
      %v537 = vadd.f32 %v525, %v533
      %v538 = vadd.f32 %v534, %v408
      %v539 = vadd.f32 %v535, %v413
      %v540 = vadd.f32 %v536, %v418
      %v541 = vadd.f32 %v537, %v423
      %v542 = vmax.f32 %v538, 0.0
      %v543 = vmax.f32 %v539, 0.0
      %v544 = vmax.f32 %v540, 0.0
      %v545 = vmax.f32 %v541, 0.0
      %550 = vrot.lane.b32.xlu0 %v542, 16
      %v551 = vpop.permute.xlu0 %550
      %552 = vrot.lane.b32.xlu0 %v543, 16
      %v553 = vpop.permute.xlu0 %552
      %554 = vrot.lane.b32.xlu0 %v544, 16
      %v555 = vpop.permute.xlu0 %554
      %556 = vrot.lane.b32.xlu0 %v545, 16
      %v557 = vpop.permute.xlu0 %556
      %vm562 = vcmask 261248
      %563 = vst.msk [vmem:[#allocation2] sm:$0xff] %vm562, %v551
      %564 = vst.msk [vmem:[#allocation2 + $0x10] sm:$0xff] %vm562, %v553
      %565 = vst.msk [vmem:[#allocation2 + $0x20] sm:$0xff] %vm562, %v555
      %566 = vst.msk [vmem:[#allocation2 + $0x30] sm:$0xff] %vm562, %v557
      %v567 = vld [vmem:[%s332 + $0x2] sm:$0x1]
      %569 = vset.pattern.permute.xlu0 0
      %570 = vperm.xlu0 %569, %v567
      %v571 = vpop.permute.xlu0 %570
      %v573 = vsub.f32 %v571, %v367
      %v575 = vand.u32 %v573, 2147483648
      %v576 = vand.u32 2147483647, %v573
      %v577 = vadd.f32 %v576, 1.0
      %v578 = vlog2.pop %v577
      %v579 = vmul.f32 %v578, 0.6931472
      %v581 = vor.u32 %v579, %v575
      %583 = vset.pattern.permute.xlu0 1
      %584 = vperm.xlu0 %583, %v567
      %v585 = vpop.permute.xlu0 %584
      %v587 = vsub.f32 %v585, %v368
      %v589 = vand.u32 %v587, 2147483648
      %v590 = vand.u32 2147483647, %v587
      %v591 = vadd.f32 %v590, 1.0
      %v592 = vlog2.pop %v591
      %v593 = vmul.f32 %v592, 0.6931472
      %v595 = vor.u32 %v593, %v589
      %v597 = vlaneseq
      %v598 = vshrl.u32 %v597, 7
      %v599 = vsub.s32 0, %v598
      %v600 = vrot.slane %v581, %v599
      %v601 = vmul.f32 %v372, %v600
      %v602 = vmul.f32 %v377, %v600
      %v603 = vmul.f32 %v382, %v600
      %v604 = vmul.f32 %v387, %v600
      %v605 = vlaneseq
      %v606 = vshrl.u32 %v605, 7
      %v607 = vsub.s32 0, %v606
      %v608 = vrot.slane %v595, %v607
      %v609 = vmul.f32 %v391, %v608
      %v610 = vmul.f32 %v395, %v608
      %v611 = vmul.f32 %v399, %v608
      %v612 = vmul.f32 %v403, %v608
      %v613 = vadd.f32 %v601, %v609
      %v614 = vadd.f32 %v602, %v610
      %v615 = vadd.f32 %v603, %v611
      %v616 = vadd.f32 %v604, %v612
      %v617 = vadd.f32 %v613, %v408
      %v618 = vadd.f32 %v614, %v413
      %v619 = vadd.f32 %v615, %v418
      %v620 = vadd.f32 %v616, %v423
      %v621 = vmax.f32 %v617, 0.0
      %v622 = vmax.f32 %v618, 0.0
      %v623 = vmax.f32 %v619, 0.0
      %v624 = vmax.f32 %v620, 0.0
      %629 = vrot.lane.b32.xlu0 %v621, 32
      %v630 = vpop.permute.xlu0 %629
      %631 = vrot.lane.b32.xlu0 %v622, 32
      %v632 = vpop.permute.xlu0 %631
      %633 = vrot.lane.b32.xlu0 %v623, 32
      %v634 = vpop.permute.xlu0 %633
      %635 = vrot.lane.b32.xlu0 %v624, 32
      %v636 = vpop.permute.xlu0 %635
      %vm641 = vcmask 392448
      %642 = vst.msk [vmem:[#allocation2] sm:$0xff] %vm641, %v630
      %643 = vst.msk [vmem:[#allocation2 + $0x10] sm:$0xff] %vm641, %v632
      %644 = vst.msk [vmem:[#allocation2 + $0x20] sm:$0xff] %vm641, %v634
      %645 = vst.msk [vmem:[#allocation2 + $0x30] sm:$0xff] %vm641, %v636
      %v646 = vld [vmem:[%s332 + $0x3] sm:$0x1]
      %648 = vset.pattern.permute.xlu0 0
      %649 = vperm.xlu0 %648, %v646
      %v650 = vpop.permute.xlu0 %649
      %v652 = vsub.f32 %v650, %v367
      %v654 = vand.u32 %v652, 2147483648
      %v655 = vand.u32 2147483647, %v652
      %v656 = vadd.f32 %v655, 1.0
      %v657 = vlog2.pop %v656
      %v658 = vmul.f32 %v657, 0.6931472
      %v660 = vor.u32 %v658, %v654
      %662 = vset.pattern.permute.xlu0 1
      %663 = vperm.xlu0 %662, %v646
      %v664 = vpop.permute.xlu0 %663
      %v666 = vsub.f32 %v664, %v368
      %v668 = vand.u32 %v666, 2147483648
      %v669 = vand.u32 2147483647, %v666
      %v670 = vadd.f32 %v669, 1.0
      %v671 = vlog2.pop %v670
      %v672 = vmul.f32 %v671, 0.6931472
      %v674 = vor.u32 %v672, %v668
      %v676 = vlaneseq
      %v677 = vshrl.u32 %v676, 7
      %v678 = vsub.s32 0, %v677
      %v679 = vrot.slane %v660, %v678
      %v680 = vmul.f32 %v372, %v679
      %v681 = vmul.f32 %v377, %v679
      %v682 = vmul.f32 %v382, %v679
      %v683 = vmul.f32 %v387, %v679
      %v684 = vlaneseq
      %v685 = vshrl.u32 %v684, 7
      %v686 = vsub.s32 0, %v685
      %v687 = vrot.slane %v674, %v686
      %v688 = vmul.f32 %v391, %v687
      %v689 = vmul.f32 %v395, %v687
      %v690 = vmul.f32 %v399, %v687
      %v691 = vmul.f32 %v403, %v687
      %v692 = vadd.f32 %v680, %v688
      %v693 = vadd.f32 %v681, %v689
      %v694 = vadd.f32 %v682, %v690
      %v695 = vadd.f32 %v683, %v691
      %v696 = vadd.f32 %v692, %v408
      %v697 = vadd.f32 %v693, %v413
      %v698 = vadd.f32 %v694, %v418
      %v699 = vadd.f32 %v695, %v423
      %v700 = vmax.f32 %v696, 0.0
      %v701 = vmax.f32 %v697, 0.0
      %v702 = vmax.f32 %v698, 0.0
      %v703 = vmax.f32 %v699, 0.0
      %708 = vrot.lane.b32.xlu0 %v700, 48
      %v709 = vpop.permute.xlu0 %708
      %710 = vrot.lane.b32.xlu0 %v701, 48
      %v711 = vpop.permute.xlu0 %710
      %712 = vrot.lane.b32.xlu0 %v702, 48
      %v713 = vpop.permute.xlu0 %712
      %714 = vrot.lane.b32.xlu0 %v703, 48
      %v715 = vpop.permute.xlu0 %714
      %vm720 = vcmask 523648
      %721 = vst.msk [vmem:[#allocation2] sm:$0xff] %vm720, %v709
      %722 = vst.msk [vmem:[#allocation2 + $0x10] sm:$0xff] %vm720, %v711
      %723 = vst.msk [vmem:[#allocation2 + $0x20] sm:$0xff] %vm720, %v713
      %724 = vst.msk [vmem:[#allocation2 + $0x30] sm:$0xff] %vm720, %v715
      %v725 = vld [vmem:[%s332 + $0x4] sm:$0x1]
      %727 = vset.pattern.permute.xlu0 0
      %728 = vperm.xlu0 %727, %v725
      %v729 = vpop.permute.xlu0 %728
      %v731 = vsub.f32 %v729, %v367
      %v733 = vand.u32 %v731, 2147483648
      %v734 = vand.u32 2147483647, %v731
      %v735 = vadd.f32 %v734, 1.0
      %v736 = vlog2.pop %v735
      %v737 = vmul.f32 %v736, 0.6931472
      %v739 = vor.u32 %v737, %v733
      %741 = vset.pattern.permute.xlu0 1
      %742 = vperm.xlu0 %741, %v725
      %v743 = vpop.permute.xlu0 %742
      %v745 = vsub.f32 %v743, %v368
      %v747 = vand.u32 %v745, 2147483648
      %v748 = vand.u32 2147483647, %v745
      %v749 = vadd.f32 %v748, 1.0
      %v750 = vlog2.pop %v749
      %v751 = vmul.f32 %v750, 0.6931472
      %v753 = vor.u32 %v751, %v747
      %v755 = vlaneseq
      %v756 = vshrl.u32 %v755, 7
      %v757 = vsub.s32 0, %v756
      %v758 = vrot.slane %v739, %v757
      %v759 = vmul.f32 %v372, %v758
      %v760 = vmul.f32 %v377, %v758
      %v761 = vmul.f32 %v382, %v758
      %v762 = vmul.f32 %v387, %v758
      %v763 = vlaneseq
      %v764 = vshrl.u32 %v763, 7
      %v765 = vsub.s32 0, %v764
      %v766 = vrot.slane %v753, %v765
      %v767 = vmul.f32 %v391, %v766
      %v768 = vmul.f32 %v395, %v766
      %v769 = vmul.f32 %v399, %v766
      %v770 = vmul.f32 %v403, %v766
      %v771 = vadd.f32 %v759, %v767
      %v772 = vadd.f32 %v760, %v768
      %v773 = vadd.f32 %v761, %v769
      %v774 = vadd.f32 %v762, %v770
      %v775 = vadd.f32 %v771, %v408
      %v776 = vadd.f32 %v772, %v413
      %v777 = vadd.f32 %v773, %v418
      %v778 = vadd.f32 %v774, %v423
      %v779 = vmax.f32 %v775, 0.0
      %v780 = vmax.f32 %v776, 0.0
      %v781 = vmax.f32 %v777, 0.0
      %v782 = vmax.f32 %v778, 0.0
      %787 = vrot.lane.b32.xlu0 %v779, 64
      %v788 = vpop.permute.xlu0 %787
      %789 = vrot.lane.b32.xlu0 %v780, 64
      %v790 = vpop.permute.xlu0 %789
      %791 = vrot.lane.b32.xlu0 %v781, 64
      %v792 = vpop.permute.xlu0 %791
      %793 = vrot.lane.b32.xlu0 %v782, 64
      %v794 = vpop.permute.xlu0 %793
      %vm799 = vcmask 654848
      %800 = vst.msk [vmem:[#allocation2] sm:$0xff] %vm799, %v788
      %801 = vst.msk [vmem:[#allocation2 + $0x10] sm:$0xff] %vm799, %v790
      %802 = vst.msk [vmem:[#allocation2 + $0x20] sm:$0xff] %vm799, %v792
      %803 = vst.msk [vmem:[#allocation2 + $0x30] sm:$0xff] %vm799, %v794
      %v804 = vld [vmem:[%s332 + $0x5] sm:$0x1]
      %806 = vset.pattern.permute.xlu0 0
      %807 = vperm.xlu0 %806, %v804
      %v808 = vpop.permute.xlu0 %807
      %v810 = vsub.f32 %v808, %v367
      %v812 = vand.u32 %v810, 2147483648
      %v813 = vand.u32 2147483647, %v810
      %v814 = vadd.f32 %v813, 1.0
      %v815 = vlog2.pop %v814
      %v816 = vmul.f32 %v815, 0.6931472
      %v818 = vor.u32 %v816, %v812
      %820 = vset.pattern.permute.xlu0 1
      %821 = vperm.xlu0 %820, %v804
      %v822 = vpop.permute.xlu0 %821
      %v824 = vsub.f32 %v822, %v368
      %v826 = vand.u32 %v824, 2147483648
      %v827 = vand.u32 2147483647, %v824
      %v828 = vadd.f32 %v827, 1.0
      %v829 = vlog2.pop %v828
      %v830 = vmul.f32 %v829, 0.6931472
      %v832 = vor.u32 %v830, %v826
      %v834 = vlaneseq
      %v835 = vshrl.u32 %v834, 7
      %v836 = vsub.s32 0, %v835
      %v837 = vrot.slane %v818, %v836
      %v838 = vmul.f32 %v372, %v837
      %v839 = vmul.f32 %v377, %v837
      %v840 = vmul.f32 %v382, %v837
      %v841 = vmul.f32 %v387, %v837
      %v842 = vlaneseq
      %v843 = vshrl.u32 %v842, 7
      %v844 = vsub.s32 0, %v843
      %v845 = vrot.slane %v832, %v844
      %v846 = vmul.f32 %v391, %v845
      %v847 = vmul.f32 %v395, %v845
      %v848 = vmul.f32 %v399, %v845
      %v849 = vmul.f32 %v403, %v845
      %v850 = vadd.f32 %v838, %v846
      %v851 = vadd.f32 %v839, %v847
      %v852 = vadd.f32 %v840, %v848
      %v853 = vadd.f32 %v841, %v849
      %v854 = vadd.f32 %v850, %v408
      %v855 = vadd.f32 %v851, %v413
      %v856 = vadd.f32 %v852, %v418
      %v857 = vadd.f32 %v853, %v423
      %v858 = vmax.f32 %v854, 0.0
      %v859 = vmax.f32 %v855, 0.0
      %v860 = vmax.f32 %v856, 0.0
      %v861 = vmax.f32 %v857, 0.0
      %866 = vrot.lane.b32.xlu0 %v858, 80
      %v867 = vpop.permute.xlu0 %866
      %868 = vrot.lane.b32.xlu0 %v859, 80
      %v869 = vpop.permute.xlu0 %868
      %870 = vrot.lane.b32.xlu0 %v860, 80
      %v871 = vpop.permute.xlu0 %870
      %872 = vrot.lane.b32.xlu0 %v861, 80
      %v873 = vpop.permute.xlu0 %872
      %vm878 = vcmask 786048
      %879 = vst.msk [vmem:[#allocation2] sm:$0xff] %vm878, %v867
      %880 = vst.msk [vmem:[#allocation2 + $0x10] sm:$0xff] %vm878, %v869
      %881 = vst.msk [vmem:[#allocation2 + $0x20] sm:$0xff] %vm878, %v871
      %882 = vst.msk [vmem:[#allocation2 + $0x30] sm:$0xff] %vm878, %v873
      %v883 = vld [vmem:[%s332 + $0x6] sm:$0x1]
      %885 = vset.pattern.permute.xlu0 0
      %886 = vperm.xlu0 %885, %v883
      %v887 = vpop.permute.xlu0 %886
      %v889 = vsub.f32 %v887, %v367
      %v891 = vand.u32 %v889, 2147483648
      %v892 = vand.u32 2147483647, %v889
      %v893 = vadd.f32 %v892, 1.0
      %v894 = vlog2.pop %v893
      %v895 = vmul.f32 %v894, 0.6931472
      %v897 = vor.u32 %v895, %v891
      %899 = vset.pattern.permute.xlu0 1
      %900 = vperm.xlu0 %899, %v883
      %v901 = vpop.permute.xlu0 %900
      %v903 = vsub.f32 %v901, %v368
      %v905 = vand.u32 %v903, 2147483648
      %v906 = vand.u32 2147483647, %v903
      %v907 = vadd.f32 %v906, 1.0
      %v908 = vlog2.pop %v907
      %v909 = vmul.f32 %v908, 0.6931472
      %v911 = vor.u32 %v909, %v905
      %v913 = vlaneseq
      %v914 = vshrl.u32 %v913, 7
      %v915 = vsub.s32 0, %v914
      %v916 = vrot.slane %v897, %v915
      %v917 = vmul.f32 %v372, %v916
      %v918 = vmul.f32 %v377, %v916
      %v919 = vmul.f32 %v382, %v916
      %v920 = vmul.f32 %v387, %v916
      %v921 = vlaneseq
      %v922 = vshrl.u32 %v921, 7
      %v923 = vsub.s32 0, %v922
      %v924 = vrot.slane %v911, %v923
      %v925 = vmul.f32 %v391, %v924
      %v926 = vmul.f32 %v395, %v924
      %v927 = vmul.f32 %v399, %v924
      %v928 = vmul.f32 %v403, %v924
      %v929 = vadd.f32 %v917, %v925
      %v930 = vadd.f32 %v918, %v926
      %v931 = vadd.f32 %v919, %v927
      %v932 = vadd.f32 %v920, %v928
      %v933 = vadd.f32 %v929, %v408
      %v934 = vadd.f32 %v930, %v413
      %v935 = vadd.f32 %v931, %v418
      %v936 = vadd.f32 %v932, %v423
      %v937 = vmax.f32 %v933, 0.0
      %v938 = vmax.f32 %v934, 0.0
      %v939 = vmax.f32 %v935, 0.0
      %v940 = vmax.f32 %v936, 0.0
      %945 = vrot.lane.b32.xlu0 %v937, 96
      %v946 = vpop.permute.xlu0 %945
      %947 = vrot.lane.b32.xlu0 %v938, 96
      %v948 = vpop.permute.xlu0 %947
      %949 = vrot.lane.b32.xlu0 %v939, 96
      %v950 = vpop.permute.xlu0 %949
      %951 = vrot.lane.b32.xlu0 %v940, 96
      %v952 = vpop.permute.xlu0 %951
      %vm957 = vcmask 917248
      %958 = vst.msk [vmem:[#allocation2] sm:$0xff] %vm957, %v946
      %959 = vst.msk [vmem:[#allocation2 + $0x10] sm:$0xff] %vm957, %v948
      %960 = vst.msk [vmem:[#allocation2 + $0x20] sm:$0xff] %vm957, %v950
      %961 = vst.msk [vmem:[#allocation2 + $0x30] sm:$0xff] %vm957, %v952
      %v962 = vld [vmem:[%s332 + $0x7] sm:$0x1]
      %964 = vset.pattern.permute.xlu0 0
      %965 = vperm.xlu0 %964, %v962
      %v966 = vpop.permute.xlu0 %965
      %v968 = vsub.f32 %v966, %v367
      %v970 = vand.u32 %v968, 2147483648
      %v971 = vand.u32 2147483647, %v968
      %v972 = vadd.f32 %v971, 1.0
      %v973 = vlog2.pop %v972
      %v974 = vmul.f32 %v973, 0.6931472
      %v976 = vor.u32 %v974, %v970
      %978 = vset.pattern.permute.xlu0 1
      %979 = vperm.xlu0 %978, %v962
      %v980 = vpop.permute.xlu0 %979
      %v982 = vsub.f32 %v980, %v368
      %v984 = vand.u32 %v982, 2147483648
      %v985 = vand.u32 2147483647, %v982
      %v986 = vadd.f32 %v985, 1.0
      %v987 = vlog2.pop %v986
      %v988 = vmul.f32 %v987, 0.6931472
      %v990 = vor.u32 %v988, %v984
      %v992 = vlaneseq
      %v993 = vshrl.u32 %v992, 7
      %v994 = vsub.s32 0, %v993
      %v995 = vrot.slane %v976, %v994
      %v996 = vmul.f32 %v372, %v995
      %v997 = vmul.f32 %v377, %v995
      %v998 = vmul.f32 %v382, %v995
      %v999 = vmul.f32 %v387, %v995
      %v1000 = vlaneseq
      %v1001 = vshrl.u32 %v1000, 7
      %v1002 = vsub.s32 0, %v1001
      %v1003 = vrot.slane %v990, %v1002
      %v1004 = vmul.f32 %v391, %v1003
      %v1005 = vmul.f32 %v395, %v1003
      %v1006 = vmul.f32 %v399, %v1003
      %v1007 = vmul.f32 %v403, %v1003
      %v1008 = vadd.f32 %v996, %v1004
      %v1009 = vadd.f32 %v997, %v1005
      %v1010 = vadd.f32 %v998, %v1006
      %v1011 = vadd.f32 %v999, %v1007
      %v1012 = vadd.f32 %v1008, %v408
      %v1013 = vadd.f32 %v1009, %v413
      %v1014 = vadd.f32 %v1010, %v418
      %v1015 = vadd.f32 %v1011, %v423
      %v1016 = vmax.f32 %v1012, 0.0
      %v1017 = vmax.f32 %v1013, 0.0
      %v1018 = vmax.f32 %v1014, 0.0
      %v1019 = vmax.f32 %v1015, 0.0
      %1024 = vrot.lane.b32.xlu0 %v1016, 112
      %v1025 = vpop.permute.xlu0 %1024
      %1026 = vrot.lane.b32.xlu0 %v1017, 112
      %v1027 = vpop.permute.xlu0 %1026
      %1028 = vrot.lane.b32.xlu0 %v1018, 112
      %v1029 = vpop.permute.xlu0 %1028
      %1030 = vrot.lane.b32.xlu0 %v1019, 112
      %v1031 = vpop.permute.xlu0 %1030
      %vm1036 = vcmask 1048448
      %1037 = vst.msk [vmem:[#allocation2] sm:$0xff] %vm1036, %v1025
      %1038 = vst.msk [vmem:[#allocation2 + $0x10] sm:$0xff] %vm1036, %v1027
      %1039 = vst.msk [vmem:[#allocation2 + $0x20] sm:$0xff] %vm1036, %v1029
      %1040 = vst.msk [vmem:[#allocation2 + $0x30] sm:$0xff] %vm1036, %v1031
      %v1041 = vld [vmem:[%s332 + $0x8] sm:$0x1]
      %1043 = vset.pattern.permute.xlu0 0
      %1044 = vperm.xlu0 %1043, %v1041
      %v1045 = vpop.permute.xlu0 %1044
      %v1047 = vsub.f32 %v1045, %v367
      %v1049 = vand.u32 %v1047, 2147483648
      %v1050 = vand.u32 2147483647, %v1047
      %v1051 = vadd.f32 %v1050, 1.0
      %v1052 = vlog2.pop %v1051
      %v1053 = vmul.f32 %v1052, 0.6931472
      %v1055 = vor.u32 %v1053, %v1049
      %1057 = vset.pattern.permute.xlu0 1
      %1058 = vperm.xlu0 %1057, %v1041
      %v1059 = vpop.permute.xlu0 %1058
      %v1061 = vsub.f32 %v1059, %v368
      %v1063 = vand.u32 %v1061, 2147483648
      %v1064 = vand.u32 2147483647, %v1061
      %v1065 = vadd.f32 %v1064, 1.0
      %v1066 = vlog2.pop %v1065
      %v1067 = vmul.f32 %v1066, 0.6931472
      %v1069 = vor.u32 %v1067, %v1063
      %v1071 = vlaneseq
      %v1072 = vshrl.u32 %v1071, 7
      %v1073 = vsub.s32 0, %v1072
      %v1074 = vrot.slane %v1055, %v1073
      %v1075 = vmul.f32 %v372, %v1074
      %v1076 = vmul.f32 %v377, %v1074
      %v1077 = vmul.f32 %v382, %v1074
      %v1078 = vmul.f32 %v387, %v1074
      %v1079 = vlaneseq
      %v1080 = vshrl.u32 %v1079, 7
      %v1081 = vsub.s32 0, %v1080
      %v1082 = vrot.slane %v1069, %v1081
      %v1083 = vmul.f32 %v391, %v1082
      %v1084 = vmul.f32 %v395, %v1082
      %v1085 = vmul.f32 %v399, %v1082
      %v1086 = vmul.f32 %v403, %v1082
      %v1087 = vadd.f32 %v1075, %v1083
      %v1088 = vadd.f32 %v1076, %v1084
      %v1089 = vadd.f32 %v1077, %v1085
      %v1090 = vadd.f32 %v1078, %v1086
      %v1091 = vadd.f32 %v1087, %v408
      %v1092 = vadd.f32 %v1088, %v413
      %v1093 = vadd.f32 %v1089, %v418
      %v1094 = vadd.f32 %v1090, %v423
      %v1095 = vmax.f32 %v1091, 0.0
      %v1096 = vmax.f32 %v1092, 0.0
      %v1097 = vmax.f32 %v1093, 0.0
      %v1098 = vmax.f32 %v1094, 0.0
      %1099 = vst.msk [vmem:[#allocation2 + $0x8] sm:$0xff] %vm483, %v1095
      %1100 = vst.msk [vmem:[#allocation2 + $0x18] sm:$0xff] %vm483, %v1096
      %1101 = vst.msk [vmem:[#allocation2 + $0x28] sm:$0xff] %vm483, %v1097
      %1102 = vst.msk [vmem:[#allocation2 + $0x38] sm:$0xff] %vm483, %v1098
      %v1103 = vld [vmem:[%s332 + $0x9] sm:$0x1]
      %1105 = vset.pattern.permute.xlu0 0
      %1106 = vperm.xlu0 %1105, %v1103
      %v1107 = vpop.permute.xlu0 %1106
      %v1109 = vsub.f32 %v1107, %v367
      %v1111 = vand.u32 %v1109, 2147483648
      %v1112 = vand.u32 2147483647, %v1109
      %v1113 = vadd.f32 %v1112, 1.0
      %v1114 = vlog2.pop %v1113
      %v1115 = vmul.f32 %v1114, 0.6931472
      %v1117 = vor.u32 %v1115, %v1111
      %1119 = vset.pattern.permute.xlu0 1
      %1120 = vperm.xlu0 %1119, %v1103
      %v1121 = vpop.permute.xlu0 %1120
      %v1123 = vsub.f32 %v1121, %v368
      %v1125 = vand.u32 %v1123, 2147483648
      %v1126 = vand.u32 2147483647, %v1123
      %v1127 = vadd.f32 %v1126, 1.0
      %v1128 = vlog2.pop %v1127
      %v1129 = vmul.f32 %v1128, 0.6931472
      %v1131 = vor.u32 %v1129, %v1125
      %v1133 = vlaneseq
      %v1134 = vshrl.u32 %v1133, 7
      %v1135 = vsub.s32 0, %v1134
      %v1136 = vrot.slane %v1117, %v1135
      %v1137 = vmul.f32 %v372, %v1136
      %v1138 = vmul.f32 %v377, %v1136
      %v1139 = vmul.f32 %v382, %v1136
      %v1140 = vmul.f32 %v387, %v1136
      %v1141 = vlaneseq
      %v1142 = vshrl.u32 %v1141, 7
      %v1143 = vsub.s32 0, %v1142
      %v1144 = vrot.slane %v1131, %v1143
      %v1145 = vmul.f32 %v391, %v1144
      %v1146 = vmul.f32 %v395, %v1144
      %v1147 = vmul.f32 %v399, %v1144
      %v1148 = vmul.f32 %v403, %v1144
      %v1149 = vadd.f32 %v1137, %v1145
      %v1150 = vadd.f32 %v1138, %v1146
      %v1151 = vadd.f32 %v1139, %v1147
      %v1152 = vadd.f32 %v1140, %v1148
      %v1153 = vadd.f32 %v1149, %v408
      %v1154 = vadd.f32 %v1150, %v413
      %v1155 = vadd.f32 %v1151, %v418
      %v1156 = vadd.f32 %v1152, %v423
      %v1157 = vmax.f32 %v1153, 0.0
      %v1158 = vmax.f32 %v1154, 0.0
      %v1159 = vmax.f32 %v1155, 0.0
      %v1160 = vmax.f32 %v1156, 0.0
      %1165 = vrot.lane.b32.xlu0 %v1157, 16
      %v1166 = vpop.permute.xlu0 %1165
      %1167 = vrot.lane.b32.xlu0 %v1158, 16
      %v1168 = vpop.permute.xlu0 %1167
      %1169 = vrot.lane.b32.xlu0 %v1159, 16
      %v1170 = vpop.permute.xlu0 %1169
      %1171 = vrot.lane.b32.xlu0 %v1160, 16
      %v1172 = vpop.permute.xlu0 %1171
      %1177 = vst.msk [vmem:[#allocation2 + $0x8] sm:$0xff] %vm562, %v1166
      %1178 = vst.msk [vmem:[#allocation2 + $0x18] sm:$0xff] %vm562, %v1168
      %1179 = vst.msk [vmem:[#allocation2 + $0x28] sm:$0xff] %vm562, %v1170
      %1180 = vst.msk [vmem:[#allocation2 + $0x38] sm:$0xff] %vm562, %v1172
      %v1181 = vld [vmem:[%s332 + $0xa] sm:$0x1]
      %1183 = vset.pattern.permute.xlu0 0
      %1184 = vperm.xlu0 %1183, %v1181
      %v1185 = vpop.permute.xlu0 %1184
      %v1187 = vsub.f32 %v1185, %v367
      %v1189 = vand.u32 %v1187, 2147483648
      %v1190 = vand.u32 2147483647, %v1187
      %v1191 = vadd.f32 %v1190, 1.0
      %v1192 = vlog2.pop %v1191
      %v1193 = vmul.f32 %v1192, 0.6931472
      %v1195 = vor.u32 %v1193, %v1189
      %1197 = vset.pattern.permute.xlu0 1
      %1198 = vperm.xlu0 %1197, %v1181
      %v1199 = vpop.permute.xlu0 %1198
      %v1201 = vsub.f32 %v1199, %v368
      %v1203 = vand.u32 %v1201, 2147483648
      %v1204 = vand.u32 2147483647, %v1201
      %v1205 = vadd.f32 %v1204, 1.0
      %v1206 = vlog2.pop %v1205
      %v1207 = vmul.f32 %v1206, 0.6931472
      %v1209 = vor.u32 %v1207, %v1203
      %v1211 = vlaneseq
      %v1212 = vshrl.u32 %v1211, 7
      %v1213 = vsub.s32 0, %v1212
      %v1214 = vrot.slane %v1195, %v1213
      %v1215 = vmul.f32 %v372, %v1214
      %v1216 = vmul.f32 %v377, %v1214
      %v1217 = vmul.f32 %v382, %v1214
      %v1218 = vmul.f32 %v387, %v1214
      %v1219 = vlaneseq
      %v1220 = vshrl.u32 %v1219, 7
      %v1221 = vsub.s32 0, %v1220
      %v1222 = vrot.slane %v1209, %v1221
      %v1223 = vmul.f32 %v391, %v1222
      %v1224 = vmul.f32 %v395, %v1222
      %v1225 = vmul.f32 %v399, %v1222
      %v1226 = vmul.f32 %v403, %v1222
      %v1227 = vadd.f32 %v1215, %v1223
      %v1228 = vadd.f32 %v1216, %v1224
      %v1229 = vadd.f32 %v1217, %v1225
      %v1230 = vadd.f32 %v1218, %v1226
      %v1231 = vadd.f32 %v1227, %v408
      %v1232 = vadd.f32 %v1228, %v413
      %v1233 = vadd.f32 %v1229, %v418
      %v1234 = vadd.f32 %v1230, %v423
      %v1235 = vmax.f32 %v1231, 0.0
      %v1236 = vmax.f32 %v1232, 0.0
      %v1237 = vmax.f32 %v1233, 0.0
      %v1238 = vmax.f32 %v1234, 0.0
      %1243 = vrot.lane.b32.xlu0 %v1235, 32
      %v1244 = vpop.permute.xlu0 %1243
      %1245 = vrot.lane.b32.xlu0 %v1236, 32
      %v1246 = vpop.permute.xlu0 %1245
      %1247 = vrot.lane.b32.xlu0 %v1237, 32
      %v1248 = vpop.permute.xlu0 %1247
      %1249 = vrot.lane.b32.xlu0 %v1238, 32
      %v1250 = vpop.permute.xlu0 %1249
      %1255 = vst.msk [vmem:[#allocation2 + $0x8] sm:$0xff] %vm641, %v1244
      %1256 = vst.msk [vmem:[#allocation2 + $0x18] sm:$0xff] %vm641, %v1246
      %1257 = vst.msk [vmem:[#allocation2 + $0x28] sm:$0xff] %vm641, %v1248
      %1258 = vst.msk [vmem:[#allocation2 + $0x38] sm:$0xff] %vm641, %v1250
      %v1259 = vld [vmem:[%s332 + $0xb] sm:$0x1]
      %1261 = vset.pattern.permute.xlu0 0
      %1262 = vperm.xlu0 %1261, %v1259
      %v1263 = vpop.permute.xlu0 %1262
      %v1265 = vsub.f32 %v1263, %v367
      %v1267 = vand.u32 %v1265, 2147483648
      %v1268 = vand.u32 2147483647, %v1265
      %v1269 = vadd.f32 %v1268, 1.0
      %v1270 = vlog2.pop %v1269
      %v1271 = vmul.f32 %v1270, 0.6931472
      %v1273 = vor.u32 %v1271, %v1267
      %1275 = vset.pattern.permute.xlu0 1
      %1276 = vperm.xlu0 %1275, %v1259
      %v1277 = vpop.permute.xlu0 %1276
      %v1279 = vsub.f32 %v1277, %v368
      %v1281 = vand.u32 %v1279, 2147483648
      %v1282 = vand.u32 2147483647, %v1279
      %v1283 = vadd.f32 %v1282, 1.0
      %v1284 = vlog2.pop %v1283
      %v1285 = vmul.f32 %v1284, 0.6931472
      %v1287 = vor.u32 %v1285, %v1281
      %v1289 = vlaneseq
      %v1290 = vshrl.u32 %v1289, 7
      %v1291 = vsub.s32 0, %v1290
      %v1292 = vrot.slane %v1273, %v1291
      %v1293 = vmul.f32 %v372, %v1292
      %v1294 = vmul.f32 %v377, %v1292
      %v1295 = vmul.f32 %v382, %v1292
      %v1296 = vmul.f32 %v387, %v1292
      %v1297 = vlaneseq
      %v1298 = vshrl.u32 %v1297, 7
      %v1299 = vsub.s32 0, %v1298
      %v1300 = vrot.slane %v1287, %v1299
      %v1301 = vmul.f32 %v391, %v1300
      %v1302 = vmul.f32 %v395, %v1300
      %v1303 = vmul.f32 %v399, %v1300
      %v1304 = vmul.f32 %v403, %v1300
      %v1305 = vadd.f32 %v1293, %v1301
      %v1306 = vadd.f32 %v1294, %v1302
      %v1307 = vadd.f32 %v1295, %v1303
      %v1308 = vadd.f32 %v1296, %v1304
      %v1309 = vadd.f32 %v1305, %v408
      %v1310 = vadd.f32 %v1306, %v413
      %v1311 = vadd.f32 %v1307, %v418
      %v1312 = vadd.f32 %v1308, %v423
      %v1313 = vmax.f32 %v1309, 0.0
      %v1314 = vmax.f32 %v1310, 0.0
      %v1315 = vmax.f32 %v1311, 0.0
      %v1316 = vmax.f32 %v1312, 0.0
      %1321 = vrot.lane.b32.xlu0 %v1313, 48
      %v1322 = vpop.permute.xlu0 %1321
      %1323 = vrot.lane.b32.xlu0 %v1314, 48
      %v1324 = vpop.permute.xlu0 %1323
      %1325 = vrot.lane.b32.xlu0 %v1315, 48
      %v1326 = vpop.permute.xlu0 %1325
      %1327 = vrot.lane.b32.xlu0 %v1316, 48
      %v1328 = vpop.permute.xlu0 %1327
      %1333 = vst.msk [vmem:[#allocation2 + $0x8] sm:$0xff] %vm720, %v1322
      %1334 = vst.msk [vmem:[#allocation2 + $0x18] sm:$0xff] %vm720, %v1324
      %1335 = vst.msk [vmem:[#allocation2 + $0x28] sm:$0xff] %vm720, %v1326
      %1336 = vst.msk [vmem:[#allocation2 + $0x38] sm:$0xff] %vm720, %v1328
      %v1337 = vld [vmem:[%s332 + $0xc] sm:$0x1]
      %1339 = vset.pattern.permute.xlu0 0
      %1340 = vperm.xlu0 %1339, %v1337
      %v1341 = vpop.permute.xlu0 %1340
      %v1343 = vsub.f32 %v1341, %v367
      %v1345 = vand.u32 %v1343, 2147483648
      %v1346 = vand.u32 2147483647, %v1343
      %v1347 = vadd.f32 %v1346, 1.0
      %v1348 = vlog2.pop %v1347
      %v1349 = vmul.f32 %v1348, 0.6931472
      %v1351 = vor.u32 %v1349, %v1345
      %1353 = vset.pattern.permute.xlu0 1
      %1354 = vperm.xlu0 %1353, %v1337
      %v1355 = vpop.permute.xlu0 %1354
      %v1357 = vsub.f32 %v1355, %v368
      %v1359 = vand.u32 %v1357, 2147483648
      %v1360 = vand.u32 2147483647, %v1357
      %v1361 = vadd.f32 %v1360, 1.0
      %v1362 = vlog2.pop %v1361
      %v1363 = vmul.f32 %v1362, 0.6931472
      %v1365 = vor.u32 %v1363, %v1359
      %v1367 = vlaneseq
      %v1368 = vshrl.u32 %v1367, 7
      %v1369 = vsub.s32 0, %v1368
      %v1370 = vrot.slane %v1351, %v1369
      %v1371 = vmul.f32 %v372, %v1370
      %v1372 = vmul.f32 %v377, %v1370
      %v1373 = vmul.f32 %v382, %v1370
      %v1374 = vmul.f32 %v387, %v1370
      %v1375 = vlaneseq
      %v1376 = vshrl.u32 %v1375, 7
      %v1377 = vsub.s32 0, %v1376
      %v1378 = vrot.slane %v1365, %v1377
      %v1379 = vmul.f32 %v391, %v1378
      %v1380 = vmul.f32 %v395, %v1378
      %v1381 = vmul.f32 %v399, %v1378
      %v1382 = vmul.f32 %v403, %v1378
      %v1383 = vadd.f32 %v1371, %v1379
      %v1384 = vadd.f32 %v1372, %v1380
      %v1385 = vadd.f32 %v1373, %v1381
      %v1386 = vadd.f32 %v1374, %v1382
      %v1387 = vadd.f32 %v1383, %v408
      %v1388 = vadd.f32 %v1384, %v413
      %v1389 = vadd.f32 %v1385, %v418
      %v1390 = vadd.f32 %v1386, %v423
      %v1391 = vmax.f32 %v1387, 0.0
      %v1392 = vmax.f32 %v1388, 0.0
      %v1393 = vmax.f32 %v1389, 0.0
      %v1394 = vmax.f32 %v1390, 0.0
      %1399 = vrot.lane.b32.xlu0 %v1391, 64
      %v1400 = vpop.permute.xlu0 %1399
      %1401 = vrot.lane.b32.xlu0 %v1392, 64
      %v1402 = vpop.permute.xlu0 %1401
      %1403 = vrot.lane.b32.xlu0 %v1393, 64
      %v1404 = vpop.permute.xlu0 %1403
      %1405 = vrot.lane.b32.xlu0 %v1394, 64
      %v1406 = vpop.permute.xlu0 %1405
      %1411 = vst.msk [vmem:[#allocation2 + $0x8] sm:$0xff] %vm799, %v1400
      %1412 = vst.msk [vmem:[#allocation2 + $0x18] sm:$0xff] %vm799, %v1402
      %1413 = vst.msk [vmem:[#allocation2 + $0x28] sm:$0xff] %vm799, %v1404
      %1414 = vst.msk [vmem:[#allocation2 + $0x38] sm:$0xff] %vm799, %v1406
      %v1415 = vld [vmem:[%s332 + $0xd] sm:$0x1]
      %1417 = vset.pattern.permute.xlu0 0
      %1418 = vperm.xlu0 %1417, %v1415
      %v1419 = vpop.permute.xlu0 %1418
      %v1421 = vsub.f32 %v1419, %v367
      %v1423 = vand.u32 %v1421, 2147483648
      %v1424 = vand.u32 2147483647, %v1421
      %v1425 = vadd.f32 %v1424, 1.0
      %v1426 = vlog2.pop %v1425
      %v1427 = vmul.f32 %v1426, 0.6931472
      %v1429 = vor.u32 %v1427, %v1423
      %1431 = vset.pattern.permute.xlu0 1
      %1432 = vperm.xlu0 %1431, %v1415
      %v1433 = vpop.permute.xlu0 %1432
      %v1435 = vsub.f32 %v1433, %v368
      %v1437 = vand.u32 %v1435, 2147483648
      %v1438 = vand.u32 2147483647, %v1435
      %v1439 = vadd.f32 %v1438, 1.0
      %v1440 = vlog2.pop %v1439
      %v1441 = vmul.f32 %v1440, 0.6931472
      %v1443 = vor.u32 %v1441, %v1437
      %v1445 = vlaneseq
      %v1446 = vshrl.u32 %v1445, 7
      %v1447 = vsub.s32 0, %v1446
      %v1448 = vrot.slane %v1429, %v1447
      %v1449 = vmul.f32 %v372, %v1448
      %v1450 = vmul.f32 %v377, %v1448
      %v1451 = vmul.f32 %v382, %v1448
      %v1452 = vmul.f32 %v387, %v1448
      %v1453 = vlaneseq
      %v1454 = vshrl.u32 %v1453, 7
      %v1455 = vsub.s32 0, %v1454
      %v1456 = vrot.slane %v1443, %v1455
      %v1457 = vmul.f32 %v391, %v1456
      %v1458 = vmul.f32 %v395, %v1456
      %v1459 = vmul.f32 %v399, %v1456
      %v1460 = vmul.f32 %v403, %v1456
      %v1461 = vadd.f32 %v1449, %v1457
      %v1462 = vadd.f32 %v1450, %v1458
      %v1463 = vadd.f32 %v1451, %v1459
      %v1464 = vadd.f32 %v1452, %v1460
      %v1465 = vadd.f32 %v1461, %v408
      %v1466 = vadd.f32 %v1462, %v413
      %v1467 = vadd.f32 %v1463, %v418
      %v1468 = vadd.f32 %v1464, %v423
      %v1469 = vmax.f32 %v1465, 0.0
      %v1470 = vmax.f32 %v1466, 0.0
      %v1471 = vmax.f32 %v1467, 0.0
      %v1472 = vmax.f32 %v1468, 0.0
      %1477 = vrot.lane.b32.xlu0 %v1469, 80
      %v1478 = vpop.permute.xlu0 %1477
      %1479 = vrot.lane.b32.xlu0 %v1470, 80
      %v1480 = vpop.permute.xlu0 %1479
      %1481 = vrot.lane.b32.xlu0 %v1471, 80
      %v1482 = vpop.permute.xlu0 %1481
      %1483 = vrot.lane.b32.xlu0 %v1472, 80
      %v1484 = vpop.permute.xlu0 %1483
      %1489 = vst.msk [vmem:[#allocation2 + $0x8] sm:$0xff] %vm878, %v1478
      %1490 = vst.msk [vmem:[#allocation2 + $0x18] sm:$0xff] %vm878, %v1480
      %1491 = vst.msk [vmem:[#allocation2 + $0x28] sm:$0xff] %vm878, %v1482
      %1492 = vst.msk [vmem:[#allocation2 + $0x38] sm:$0xff] %vm878, %v1484
      %v1493 = vld [vmem:[%s332 + $0xe] sm:$0x1]
      %1495 = vset.pattern.permute.xlu0 0
      %1496 = vperm.xlu0 %1495, %v1493
      %v1497 = vpop.permute.xlu0 %1496
      %v1499 = vsub.f32 %v1497, %v367
      %v1501 = vand.u32 %v1499, 2147483648
      %v1502 = vand.u32 2147483647, %v1499
      %v1503 = vadd.f32 %v1502, 1.0
      %v1504 = vlog2.pop %v1503
      %v1505 = vmul.f32 %v1504, 0.6931472
      %v1507 = vor.u32 %v1505, %v1501
      %1509 = vset.pattern.permute.xlu0 1
      %1510 = vperm.xlu0 %1509, %v1493
      %v1511 = vpop.permute.xlu0 %1510
      %v1513 = vsub.f32 %v1511, %v368
      %v1515 = vand.u32 %v1513, 2147483648
      %v1516 = vand.u32 2147483647, %v1513
      %v1517 = vadd.f32 %v1516, 1.0
      %v1518 = vlog2.pop %v1517
      %v1519 = vmul.f32 %v1518, 0.6931472
      %v1521 = vor.u32 %v1519, %v1515
      %v1523 = vlaneseq
      %v1524 = vshrl.u32 %v1523, 7
      %v1525 = vsub.s32 0, %v1524
      %v1526 = vrot.slane %v1507, %v1525
      %v1527 = vmul.f32 %v372, %v1526
      %v1528 = vmul.f32 %v377, %v1526
      %v1529 = vmul.f32 %v382, %v1526
      %v1530 = vmul.f32 %v387, %v1526
      %v1531 = vlaneseq
      %v1532 = vshrl.u32 %v1531, 7
      %v1533 = vsub.s32 0, %v1532
      %v1534 = vrot.slane %v1521, %v1533
      %v1535 = vmul.f32 %v391, %v1534
      %v1536 = vmul.f32 %v395, %v1534
      %v1537 = vmul.f32 %v399, %v1534
      %v1538 = vmul.f32 %v403, %v1534
      %v1539 = vadd.f32 %v1527, %v1535
      %v1540 = vadd.f32 %v1528, %v1536
      %v1541 = vadd.f32 %v1529, %v1537
      %v1542 = vadd.f32 %v1530, %v1538
      %v1543 = vadd.f32 %v1539, %v408
      %v1544 = vadd.f32 %v1540, %v413
      %v1545 = vadd.f32 %v1541, %v418
      %v1546 = vadd.f32 %v1542, %v423
      %v1547 = vmax.f32 %v1543, 0.0
      %v1548 = vmax.f32 %v1544, 0.0
      %v1549 = vmax.f32 %v1545, 0.0
      %v1550 = vmax.f32 %v1546, 0.0
      %1555 = vrot.lane.b32.xlu0 %v1547, 96
      %v1556 = vpop.permute.xlu0 %1555
      %1557 = vrot.lane.b32.xlu0 %v1548, 96
      %v1558 = vpop.permute.xlu0 %1557
      %1559 = vrot.lane.b32.xlu0 %v1549, 96
      %v1560 = vpop.permute.xlu0 %1559
      %1561 = vrot.lane.b32.xlu0 %v1550, 96
      %v1562 = vpop.permute.xlu0 %1561
      %1567 = vst.msk [vmem:[#allocation2 + $0x8] sm:$0xff] %vm957, %v1556
      %1568 = vst.msk [vmem:[#allocation2 + $0x18] sm:$0xff] %vm957, %v1558
      %1569 = vst.msk [vmem:[#allocation2 + $0x28] sm:$0xff] %vm957, %v1560
      %1570 = vst.msk [vmem:[#allocation2 + $0x38] sm:$0xff] %vm957, %v1562
      %v1571 = vld [vmem:[%s332 + $0xf] sm:$0x1]
      %1573 = vset.pattern.permute.xlu0 0
      %1574 = vperm.xlu0 %1573, %v1571
      %v1575 = vpop.permute.xlu0 %1574
      %v1577 = vsub.f32 %v1575, %v367
      %v1579 = vand.u32 %v1577, 2147483648
      %v1580 = vand.u32 2147483647, %v1577
      %v1581 = vadd.f32 %v1580, 1.0
      %v1582 = vlog2.pop %v1581
      %v1583 = vmul.f32 %v1582, 0.6931472
      %v1585 = vor.u32 %v1583, %v1579
      %1587 = vset.pattern.permute.xlu0 1
      %1588 = vperm.xlu0 %1587, %v1571
      %v1589 = vpop.permute.xlu0 %1588
      %v1591 = vsub.f32 %v1589, %v368
      %v1593 = vand.u32 %v1591, 2147483648
      %v1594 = vand.u32 2147483647, %v1591
      %v1595 = vadd.f32 %v1594, 1.0
      %v1596 = vlog2.pop %v1595
      %v1597 = vmul.f32 %v1596, 0.6931472
      %v1599 = vor.u32 %v1597, %v1593
      %v1601 = vlaneseq
      %v1602 = vshrl.u32 %v1601, 7
      %v1603 = vsub.s32 0, %v1602
      %v1604 = vrot.slane %v1585, %v1603
      %v1605 = vmul.f32 %v372, %v1604
      %v1606 = vmul.f32 %v377, %v1604
      %v1607 = vmul.f32 %v382, %v1604
      %v1608 = vmul.f32 %v387, %v1604
      %v1609 = vlaneseq
      %v1610 = vshrl.u32 %v1609, 7
      %v1611 = vsub.s32 0, %v1610
      %v1612 = vrot.slane %v1599, %v1611
      %v1613 = vmul.f32 %v391, %v1612
      %v1614 = vmul.f32 %v395, %v1612
      %v1615 = vmul.f32 %v399, %v1612
      %v1616 = vmul.f32 %v403, %v1612
      %v1617 = vadd.f32 %v1605, %v1613
      %v1618 = vadd.f32 %v1606, %v1614
      %v1619 = vadd.f32 %v1607, %v1615
      %v1620 = vadd.f32 %v1608, %v1616
      %v1621 = vadd.f32 %v1617, %v408
      %v1622 = vadd.f32 %v1618, %v413
      %v1623 = vadd.f32 %v1619, %v418
      %v1624 = vadd.f32 %v1620, %v423
      %v1625 = vmax.f32 %v1621, 0.0
      %v1626 = vmax.f32 %v1622, 0.0
      %v1627 = vmax.f32 %v1623, 0.0
      %v1628 = vmax.f32 %v1624, 0.0
      %1633 = vrot.lane.b32.xlu0 %v1625, 112
      %v1634 = vpop.permute.xlu0 %1633
      %1635 = vrot.lane.b32.xlu0 %v1626, 112
      %v1636 = vpop.permute.xlu0 %1635
      %1637 = vrot.lane.b32.xlu0 %v1627, 112
      %v1638 = vpop.permute.xlu0 %1637
      %1639 = vrot.lane.b32.xlu0 %v1628, 112
      %v1640 = vpop.permute.xlu0 %1639
      %1645 = vst.msk [vmem:[#allocation2 + $0x8] sm:$0xff] %vm1036, %v1634
      %1646 = vst.msk [vmem:[#allocation2 + $0x18] sm:$0xff] %vm1036, %v1636
      %1647 = vst.msk [vmem:[#allocation2 + $0x28] sm:$0xff] %vm1036, %v1638
      %1648 = vst.msk [vmem:[#allocation2 + $0x38] sm:$0xff] %vm1036, %v1640
      %v1649 = vld [vmem:[#allocation2] sm:$0xff]
      %v1650 = vld [vmem:[#allocation2 + $0x8] sm:$0xff]
      %v1651 = vld [vmem:[#allocation2 + $0x10] sm:$0xff]
      %v1652 = vld [vmem:[#allocation2 + $0x18] sm:$0xff]
      %v1653 = vld [vmem:[#allocation2 + $0x20] sm:$0xff]
      %v1654 = vld [vmem:[#allocation2 + $0x28] sm:$0xff]
      %v1655 = vld [vmem:[#allocation2 + $0x30] sm:$0xff]
      %v1656 = vld [vmem:[#allocation2 + $0x38] sm:$0xff]
      %v1657 = vpack.c.bf16 %v354, %v353
      %v1658 = vpack.c.bf16 %v356, %v355
      %v1659 = vpack.c.bf16 %v1651, %v1649
      %v1660 = vpack.c.bf16 %v1652, %v1650
      %v1661 = vpack.c.bf16 %v1655, %v1653
      %v1662 = vpack.c.bf16 %v1656, %v1654
      %1664 = vset.pattern.permute.xlu0 0
      %1665 = vperm.xlu0 %1664, %v362
      %v1666 = vpop.permute.xlu0 %1665
      %1669 = vset.pattern.permute.xlu0 0
      %1670 = vperm.xlu0 %1669, %v363
      %v1671 = vpop.permute.xlu0 %1670
      %1674 = vset.pattern.permute.xlu0 0
      %1675 = vperm.xlu0 %1674, %v364
      %v1676 = vpop.permute.xlu0 %1675
      %1679 = vset.pattern.permute.xlu0 0
      %1680 = vperm.xlu0 %1679, %v365
      %v1681 = vpop.permute.xlu0 %1680
      %vm1683 = vcmask 261120
      %v1685 = vsel %vm1683, %v1657, 0
      %v1688 = vsel %vm1683, %v1658, 0
      %1690 = vmatprep.subr.bf16.mxu0 %v1660
      %1691 = vmatpush1.bf16.msra.mxu0 %v1659
      %1692 = vmatprep.subr.bf16.mxu0 %v1662
      %1693 = vmatpush1.bf16.msra.mxu0 %v1661
      %1694 = vmatprep.subr.bf16.mxu0 0
      %1695 = vmatpush1.bf16.msra.mxu0 0
      %1696 = vmatprep.subr.bf16.mxu0 0
      %1697 = vmatpush1.bf16.msra.mxu0 0
      %1698 = vmatprep.subr.bf16.mxu0 0
      %1699 = vmatpush1.bf16.msra.mxu0 0
      %1700 = vmatprep.subr.bf16.mxu0 0
      %1701 = vmatpush1.bf16.msra.mxu0 0
      %1702 = vmatprep.subr.bf16.mxu0 0
      %1703 = vmatpush1.bf16.msra.mxu0 0
      %1704 = vmatprep.subr.bf16.mxu0 0
      %1705 = vmatpush1.bf16.msra.mxu0 0
      %1706 = vmatprep.subr.bf16.mxu0 0
      %1707 = vmatpush1.bf16.msra.mxu0 0
      %1708 = vmatprep.subr.bf16.mxu0 0
      %1709 = vmatpush1.bf16.msra.mxu0 0
      %1710 = vmatprep.subr.bf16.mxu0 0
      %1711 = vmatpush1.bf16.msra.mxu0 0
      %1712 = vmatprep.subr.bf16.mxu0 0
      %1713 = vmatpush1.bf16.msra.mxu0 0
      %1714 = vmatprep.subr.bf16.mxu0 0
      %1715 = vmatpush1.bf16.msra.mxu0 0
      %1716 = vmatprep.subr.bf16.mxu0 0
      %1717 = vmatpush1.bf16.msra.mxu0 0
      %1718 = vmatprep.subr.bf16.mxu0 0
      %1719 = vmatpush1.bf16.msra.mxu0 0
      %1720 = vmatprep.subr.bf16.mxu0 0
      %1721 = vmatpush1.bf16.msra.mxu0 0
      %1722 = vmatprep.mubr.bf16.mxu0 0
      %1723 = vmatmul.mubr.bf16.gmra.mrb[0].mxu0 %v1685
      %v1724 = vpop.f32.mrb[0].mxu0
      %v1725 = vadd.f32 %v1666, %v1724
      %v1726 = vpop.f32.mrb[0].mxu0
      %v1727 = vadd.f32 %v1666, %v1726
      %v1728 = vpop.f32.mrb[0].mxu0
      %v1729 = vadd.f32 %v1671, %v1728
      %v1730 = vpop.f32.mrb[0].mxu0
      %v1731 = vadd.f32 %v1671, %v1730
      %1732 = vmatprep.mubr.bf16.mxu0 0
      %1733 = vmatmul.mubr.bf16.gmra.mrb[0].mxu0 %v1688
      %v1734 = vpop.f32.mrb[0].mxu0
      %v1735 = vadd.f32 %v1676, %v1734
      %v1736 = vpop.f32.mrb[0].mxu0
      %v1737 = vadd.f32 %v1676, %v1736
      %v1738 = vpop.f32.mrb[0].mxu0
      %v1739 = vadd.f32 %v1681, %v1738
      %v1740 = vpop.f32.mrb[0].mxu0
      %v1741 = vadd.f32 %v1681, %v1740
      %1742 = vdwg.mxu0
      %v1743 = vmax.f32 %v1725, 0.0
      %v1744 = vmax.f32 %v1727, 0.0
      %v1745 = vmax.f32 %v1729, 0.0
      %v1746 = vmax.f32 %v1731, 0.0
      %v1747 = vmax.f32 %v1735, 0.0
      %v1748 = vmax.f32 %v1737, 0.0
      %v1749 = vmax.f32 %v1739, 0.0
      %v1750 = vmax.f32 %v1741, 0.0
      %v1751 = vpack.c.bf16 %v357, %v357
      %v1752 = vpack.c.bf16 %v1745, %v1743
      %v1753 = vpack.c.bf16 %v1746, %v1744
      %v1754 = vpack.c.bf16 %v1749, %v1747
      %v1755 = vpack.c.bf16 %v1750, %v1748
      %1757 = vset.pattern.permute.xlu0 0
      %1758 = vperm.xlu0 %1757, %v366
      %v1759 = vpop.permute.xlu0 %1758
      %v1762 = vsel %vm1683, %v1751, 0
      %1764 = vmatprep.subr.bf16.mxu0 %v1753
      %1765 = vmatpush1.bf16.msra.mxu0 %v1752
      %1766 = vmatprep.subr.bf16.mxu0 %v1755
      %1767 = vmatpush1.bf16.msra.mxu0 %v1754
      %1768 = vmatprep.subr.bf16.mxu0 0
      %1769 = vmatpush1.bf16.msra.mxu0 0
      %1770 = vmatprep.subr.bf16.mxu0 0
      %1771 = vmatpush1.bf16.msra.mxu0 0
      %1772 = vmatprep.subr.bf16.mxu0 0
      %1773 = vmatpush1.bf16.msra.mxu0 0
      %1774 = vmatprep.subr.bf16.mxu0 0
      %1775 = vmatpush1.bf16.msra.mxu0 0
      %1776 = vmatprep.subr.bf16.mxu0 0
      %1777 = vmatpush1.bf16.msra.mxu0 0
      %1778 = vmatprep.subr.bf16.mxu0 0
      %1779 = vmatpush1.bf16.msra.mxu0 0
      %1780 = vmatprep.subr.bf16.mxu0 0
      %1781 = vmatpush1.bf16.msra.mxu0 0
      %1782 = vmatprep.subr.bf16.mxu0 0
      %1783 = vmatpush1.bf16.msra.mxu0 0
      %1784 = vmatprep.subr.bf16.mxu0 0
      %1785 = vmatpush1.bf16.msra.mxu0 0
      %1786 = vmatprep.subr.bf16.mxu0 0
      %1787 = vmatpush1.bf16.msra.mxu0 0
      %1788 = vmatprep.subr.bf16.mxu0 0
      %1789 = vmatpush1.bf16.msra.mxu0 0
      %1790 = vmatprep.subr.bf16.mxu0 0
      %1791 = vmatpush1.bf16.msra.mxu0 0
      %1792 = vmatprep.subr.bf16.mxu0 0
      %1793 = vmatpush1.bf16.msra.mxu0 0
      %1794 = vmatprep.subr.bf16.mxu0 0
      %1795 = vmatpush1.bf16.msra.mxu0 0
      %1796 = vmatprep.mubr.bf16.mxu0 0
      %1797 = vmatmul.mubr.bf16.gmra.mrb[0].mxu0 %v1762
      %v1798 = vpop.f32.mrb[0].mxu0
      %v1799 = vadd.f32 %v1759, %v1798
      %v1800 = vpop.f32.mrb[0].mxu0
      %v1801 = vadd.f32 %v1759, %v1800
      %v1802 = vpop.f32.mrb[0].mxu0
      %v1803 = vpop.f32.mrb[0].mxu0
      %1804 = vdwg.mxu0
      %v1807 = vcombine.low %v1799, %v1801
      %1809 = vst [vmem:[%s346] sm:$0xff] %v1807
      %s1810 = smul.u32 2, %s24
      %p1811 = scmp.lt.s32.totalorder %s23, 3
      %s1812 = scalar_select %p1811, %s23, 3
      %p1813 = scmp.lt.s32.totalorder %s1810, 1
      %s1814 = scalar_select %p1813, %s1810, 1
      %s1815 = smul.addr %s1812, 2
      %s1816 = sadd.s32 %s1814, %s1815
      %s1817 = smul.addr %s1816, 4
      %s1818 = scalar_lea.vmem %s8, %s1817
      // Predicated region
      $region53: #{fwd.1} parent=51 // pred_check
        %p1819 = pneg %p229
      $region54: #{fwd.1} parent=51 // pred_check_branch
        %1821 = sbr.rel (%p1819) target = $region56
      $region55: #{fwd.1} parent=51 // pred_region
        %s1822 = smul.u32 2, %s24
      $region56: #{fwd.1} parent=51 // pred_fallthru
        _
    $region52: #{fwd.1} parent=5 // pred_fallthru
      _
    %p1823 = scmp.le.s32.totalorder 2, %s14
    // Predicated region
    $region57: #{fwd.1} parent=5 // pred_check
      %p1824 = pneg %p1823
    $region58: #{fwd.1} parent=5 // pred_check_branch
      %1826 = sbr.rel (%p1824) target = $region60
    $region59: #{fwd.1} parent=5 // pred_region
      %s1827 = ssub.s32 %s14, 2
      // Predicated region
      $region61: #{fwd.1} parent=59 // pred_check
        %p1828 = pneg %p235
      $region62: #{fwd.1} parent=59 // pred_check_branch
        %1830 = sbr.rel (%p1828) target = $region64
      $region63: #{fwd.1} parent=59 // pred_region
        %s1831 = smul.u32 2, %s26
        %p1832 = scmp.lt.s32.totalorder %s25, 3
        %s1833 = scalar_select %p1832, %s25, 3
        %p1834 = scmp.lt.s32.totalorder %s1831, 1
        %s1835 = scalar_select %p1834, %s1831, 1
        %s1836 = smul.addr %s1833, 2
        %s1837 = sadd.s32 %s1835, %s1836
        %s1838 = smul.addr %s1837, 4
        %s1839 = scalar_lea.vmem %s8, %s1838
      $region64: #{fwd.1} parent=59 // pred_fallthru
        _
    $region60: #{fwd.1} parent=5 // pred_fallthru
      _
  $region6: #{fwd.1} parent=0 // loop_footer
    %s18 = sadd.s32 1, %s14
  $region7: #{fwd.1} parent=0 // loop_footer_branch
    %13 = sbr.rel target = $region3
  $region8: #{fwd.1} parent=0 // loop_exit
    _

</llo_original>
